<compile_context>
chip_gen: v5e
topology: v5e:2x2
jax: 0.10.0
libtpu: 0.0.40
codegen_flags: <defaults>
</compile_context>

<pallas_src>
import jax
import jax.numpy as jnp
from jax.experimental import pallas as pl
from jax.experimental.pallas import tpu as pltpu


def bigger_model_kernel(
    x_ref,
    w_fc1_ref, b_fc1_ref,
    w_b1_ref, b_b1_ref,
    w_b2_ref, b_b2_ref,
    w_b3_ref, b_b3_ref,
    w_b4_ref, b_b4_ref,
    w_fc2_ref, b_fc2_ref,
    o_ref,
):
    """Fused MLP forward for one (batch_tile, input_dim) tile; weights VMEM-resident."""
    x = x_ref[...]

    # fc1: input_dim -> hidden (no activation, matches the PyTorch module)
    h = jnp.dot(x.astype(w_fc1_ref.dtype), w_fc1_ref[...],
                preferred_element_type=jnp.float32) + b_fc1_ref[...]

    # blocks: Linear(h->4h), ReLU, Linear(4h->h), ReLU, Linear(h->4h), ReLU, Linear(4h->h)
    h = jnp.maximum(
        jnp.dot(h.astype(w_b1_ref.dtype), w_b1_ref[...],
                preferred_element_type=jnp.float32) + b_b1_ref[...], 0.0)
    h = jnp.maximum(
        jnp.dot(h.astype(w_b2_ref.dtype), w_b2_ref[...],
                preferred_element_type=jnp.float32) + b_b2_ref[...], 0.0)
    h = jnp.maximum(
        jnp.dot(h.astype(w_b3_ref.dtype), w_b3_ref[...],
                preferred_element_type=jnp.float32) + b_b3_ref[...], 0.0)
    h = jnp.dot(h.astype(w_b4_ref.dtype), w_b4_ref[...],
                preferred_element_type=jnp.float32) + b_b4_ref[...]
    # (no ReLU after the last block linear, matching the nn.Sequential)

    # fc2: hidden -> 1, done on VPU/XLU instead of an N=1 MXU matmul.
    # Transpose the (tm, hidden) tile (XLU, off the VALU/MXU critical path), then
    # broadcast-multiply by the (hidden, 1) fc2 weight column and sublane-reduce:
    # the result is already a lane-dense (1, tm) logits row.
    hT = h.T                                            # (hidden, tm)
    w2 = w_fc2_ref[...].astype(jnp.float32)             # (hidden, 1)
    logits = jnp.sum(hT * w2, axis=0, keepdims=True) + b_fc2_ref[...]   # (1, tm)

    o_ref[...] = jax.nn.sigmoid(logits)                 # EUP exp path, f32


def bigger_model_forward(x, params, *, batch_tile=128, matmul_dtype=None):
    """x: [B, input_dim] float32. params: dict of (in,out) weights and (1,out) biases.

    matmul_dtype: optionally cast the five big matmul weight operands (e.g. to
    jnp.bfloat16 on v6e/v7x). Accumulation stays f32; elementwise work stays f32.
    """
    orig_B, input_dim = x.shape
    hidden = params["w_fc1"].shape[1]
    hidden4 = hidden * 4

    if matmul_dtype is not None:
        params = dict(params)
        for name in ("w_fc1", "w_b1", "w_b2", "w_b3", "w_b4"):
            params[name] = params[name].astype(matmul_dtype)

    # Pad ragged batches up to a multiple of batch_tile (sliced off below).
    pad = (-orig_B) % batch_tile
    if pad:
        x = jnp.pad(x, ((0, pad), (0, 0)))
    B = x.shape[0]
    num_tiles = B // batch_tile

    # Weights/biases use full-array blocks with constant index_map -> loaded once,
    # not re-DMA'd per grid step. Only x and the output row-slab are tiled.
    def full_spec(shape):
        return pl.BlockSpec(shape, lambda i: (0,) * len(shape))

    in_specs = [
        pl.BlockSpec((batch_tile, input_dim), lambda i: (i, 0)),      # x
        full_spec((input_dim, hidden)),  full_spec((1, hidden)),      # fc1
        full_spec((hidden, hidden4)),    full_spec((1, hidden4)),     # blocks[0]
        full_spec((hidden4, hidden)),    full_spec((1, hidden)),      # blocks[2]
        full_spec((hidden, hidden4)),    full_spec((1, hidden4)),     # blocks[4]
        full_spec((hidden4, hidden)),    full_spec((1, hidden)),      # blocks[6]
        full_spec((hidden, 1)),          full_spec((1, 1)),           # fc2
    ]
    # Lane-dense output: a (1, B) slab, each step writes its own (1, batch_tile) block.
    out_spec = pl.BlockSpec((1, batch_tile), lambda i: (0, i))

    out_row = pl.pallas_call(
        bigger_model_kernel,
        out_shape=jax.ShapeDtypeStruct((1, B), jnp.float32),
        grid_spec=pltpu.PrefetchScalarGridSpec(
            num_scalar_prefetch=0,
            grid=(num_tiles,),
            in_specs=in_specs,
            out_specs=out_spec,
        ),
        compiler_params=pltpu.CompilerParams(
            # Batch axis is embarrassingly parallel -> shards across the 2 TCs on v7x.
            dimension_semantics=("parallel",)
        ),
    )(
        x,
        params["w_fc1"], params["b_fc1"],
        params["w_b1"], params["b_b1"],
        params["w_b2"], params["b_b2"],
        params["w_b3"], params["b_b3"],
        params["w_b4"], params["b_b4"],
        params["w_fc2"], params["b_fc2"],
    )

    # (1, B) -> (B, 1), drop any batch padding.
    return out_row.reshape(B, 1)[:orig_B]


def init_params(key, input_dim, hidden):
    """Deterministic synthetic init (small-scale normal), shapes match the module."""
    hidden4 = hidden * 4
    shapes = {
        "w_fc1": (input_dim, hidden),  "b_fc1": (1, hidden),
        "w_b1":  (hidden, hidden4),    "b_b1":  (1, hidden4),
        "w_b2":  (hidden4, hidden),    "b_b2":  (1, hidden),
        "w_b3":  (hidden, hidden4),    "b_b3":  (1, hidden4),
        "w_b4":  (hidden4, hidden),    "b_b4":  (1, hidden),
        "w_fc2": (hidden, 1),          "b_fc2": (1, 1),
    }
    params = {}
    keys = jax.random.split(key, len(shapes))
    for k, (name, shp) in zip(keys, sorted(shapes.items())):
        params[name] = (0.05 * jax.random.normal(k, shp)).astype(jnp.float32)
    return params


def reference_forward(x, p):
    """Pure-JAX reference for a sanity check."""
    h = x @ p["w_fc1"] + p["b_fc1"]
    h = jnp.maximum(h @ p["w_b1"] + p["b_b1"], 0.0)
    h = jnp.maximum(h @ p["w_b2"] + p["b_b2"], 0.0)
    h = jnp.maximum(h @ p["w_b3"] + p["b_b3"], 0.0)
    h = h @ p["w_b4"] + p["b_b4"]
    return jax.nn.sigmoid(h @ p["w_fc2"] + p["b_fc2"])


if __name__ == "__main__":
    key = jax.random.PRNGKey(0)
    k_x, k_p = jax.random.split(key)

    # hidden=128 is the module default; hidden*4 = 512. batch=256, batch_tile=128
    # -> grid of 2 parallel steps (both TCs busy on v7x), full 128-row MXU tiles.
    batch, input_dim, hidden = 256, 64, 128
    x = jax.random.normal(k_x, (batch, input_dim), dtype=jnp.float32)
    params = init_params(k_p, input_dim, hidden)

    out = bigger_model_forward(x, params, batch_tile=128)
    out = jax.block_until_ready(out)

    ref = reference_forward(x, params)
    assert out.shape == (batch, 1)
    assert jnp.allclose(out, ref, atol=5e-5, rtol=5e-5), "mismatch vs JAX reference"

    print("KERNEL_OK")
</pallas_src>

<mosaic_0001>
module attributes {stable_mosaic.version = 11 : i64} {
  func.func @bigger_model_kernel(%arg0: i32, %arg1: memref<128x64xf32, #tpu.memory_space<vmem>>, %arg2: memref<64x128xf32, #tpu.memory_space<vmem>>, %arg3: memref<1x128xf32, #tpu.memory_space<vmem>>, %arg4: memref<128x512xf32, #tpu.memory_space<vmem>>, %arg5: memref<1x512xf32, #tpu.memory_space<vmem>>, %arg6: memref<512x128xf32, #tpu.memory_space<vmem>>, %arg7: memref<1x128xf32, #tpu.memory_space<vmem>>, %arg8: memref<128x512xf32, #tpu.memory_space<vmem>>, %arg9: memref<1x512xf32, #tpu.memory_space<vmem>>, %arg10: memref<512x128xf32, #tpu.memory_space<vmem>>, %arg11: memref<1x128xf32, #tpu.memory_space<vmem>>, %arg12: memref<128x1xf32, #tpu.memory_space<vmem>>, %arg13: memref<1x1xf32, #tpu.memory_space<vmem>>, %arg14: memref<1x128xf32, #tpu.memory_space<vmem>>) attributes {dimension_semantics = [#tpu.dimension_semantics<parallel>], iteration_bounds = array<i64: 2>, scalar_prefetch = 0 : i64, scratch_operands = 0 : i64, tpu.core_type = #tpu.core_type<tc>, window_params = [{transform_indices = @transform_0, window_bounds = array<i64: 128, 64>}, {pipeline_mode = #tpu.pipeline_mode<synchronous>, transform_indices = @transform_1, window_bounds = array<i64: 64, 128>}, {pipeline_mode = #tpu.pipeline_mode<synchronous>, transform_indices = @transform_2, window_bounds = array<i64: 1, 128>}, {pipeline_mode = #tpu.pipeline_mode<synchronous>, transform_indices = @transform_3, window_bounds = array<i64: 128, 512>}, {pipeline_mode = #tpu.pipeline_mode<synchronous>, transform_indices = @transform_4, window_bounds = array<i64: 1, 512>}, {pipeline_mode = #tpu.pipeline_mode<synchronous>, transform_indices = @transform_5, window_bounds = array<i64: 512, 128>}, {pipeline_mode = #tpu.pipeline_mode<synchronous>, transform_indices = @transform_6, window_bounds = array<i64: 1, 128>}, {pipeline_mode = #tpu.pipeline_mode<synchronous>, transform_indices = @transform_7, window_bounds = array<i64: 128, 512>}, {pipeline_mode = #tpu.pipeline_mode<synchronous>, transform_indices = @transform_8, window_bounds = array<i64: 1, 512>}, {pipeline_mode = #tpu.pipeline_mode<synchronous>, transform_indices = @transform_9, window_bounds = array<i64: 512, 128>}, {pipeline_mode = #tpu.pipeline_mode<synchronous>, transform_indices = @transform_10, window_bounds = array<i64: 1, 128>}, {pipeline_mode = #tpu.pipeline_mode<synchronous>, transform_indices = @transform_11, window_bounds = array<i64: 128, 1>}, {pipeline_mode = #tpu.pipeline_mode<synchronous>, transform_indices = @transform_12, window_bounds = array<i64: 1, 1>}, {transform_indices = @transform_13, window_bounds = array<i64: 1, 128>}]} {
    %c0 = arith.constant 0 : index
    %c0_0 = arith.constant 0 : index
    %0 = vector.load %arg1[%c0, %c0_0] : memref<128x64xf32, #tpu.memory_space<vmem>>, vector<128x64xf32>
    %c0_1 = arith.constant 0 : index
    %c0_2 = arith.constant 0 : index
    %1 = vector.load %arg2[%c0_1, %c0_2] : memref<64x128xf32, #tpu.memory_space<vmem>>, vector<64x128xf32>
    %cst = arith.constant dense<0.000000e+00> : vector<128x128xf32>
    %2 = tpu.matmul %0, %1, %cst {dimension_numbers = #tpu.dot_dimension_numbers<[1], [0], [0], [1], [0, 0, 1, 1], [], []>} : vector<128x64xf32>, vector<64x128xf32>, vector<128x128xf32> -> vector<128x128xf32>
    %c0_3 = arith.constant 0 : index
    %c0_4 = arith.constant 0 : index
    %3 = vector.load %arg3[%c0_3, %c0_4] : memref<1x128xf32, #tpu.memory_space<vmem>>, vector<1x128xf32>
    %4 = vector.broadcast %3 : vector<1x128xf32> to vector<128x128xf32>
    %5 = arith.addf %2, %4 : vector<128x128xf32>
    %c0_5 = arith.constant 0 : index
    %c0_6 = arith.constant 0 : index
    %6 = vector.load %arg4[%c0_5, %c0_6] : memref<128x512xf32, #tpu.memory_space<vmem>>, vector<128x512xf32>
    %cst_7 = arith.constant dense<0.000000e+00> : vector<128x512xf32>
    %7 = tpu.matmul %5, %6, %cst_7 {dimension_numbers = #tpu.dot_dimension_numbers<[1], [0], [0], [1], [0, 0, 1, 1], [], []>} : vector<128x128xf32>, vector<128x512xf32>, vector<128x512xf32> -> vector<128x512xf32>
    %c0_8 = arith.constant 0 : index
    %c0_9 = arith.constant 0 : index
    %8 = vector.load %arg5[%c0_8, %c0_9] : memref<1x512xf32, #tpu.memory_space<vmem>>, vector<1x512xf32>
    %9 = vector.broadcast %8 : vector<1x512xf32> to vector<128x512xf32>
    %10 = arith.addf %7, %9 : vector<128x512xf32>
    %cst_10 = arith.constant 0.000000e+00 : f32
    %11 = vector.broadcast %cst_10 : f32 to vector<128x512xf32>
    %12 = arith.maximumf %10, %11 : vector<128x512xf32>
    %c0_11 = arith.constant 0 : index
    %c0_12 = arith.constant 0 : index
    %13 = vector.load %arg6[%c0_11, %c0_12] : memref<512x128xf32, #tpu.memory_space<vmem>>, vector<512x128xf32>
    %cst_13 = arith.constant dense<0.000000e+00> : vector<128x128xf32>
    %14 = tpu.matmul %12, %13, %cst_13 {dimension_numbers = #tpu.dot_dimension_numbers<[1], [0], [0], [1], [0, 0, 1, 1], [], []>} : vector<128x512xf32>, vector<512x128xf32>, vector<128x128xf32> -> vector<128x128xf32>
    %c0_14 = arith.constant 0 : index
    %c0_15 = arith.constant 0 : index
    %15 = vector.load %arg7[%c0_14, %c0_15] : memref<1x128xf32, #tpu.memory_space<vmem>>, vector<1x128xf32>
    %16 = vector.broadcast %15 : vector<1x128xf32> to vector<128x128xf32>
    %17 = arith.addf %14, %16 : vector<128x128xf32>
    %cst_16 = arith.constant 0.000000e+00 : f32
    %18 = vector.broadcast %cst_16 : f32 to vector<128x128xf32>
    %19 = arith.maximumf %17, %18 : vector<128x128xf32>
    %c0_17 = arith.constant 0 : index
    %c0_18 = arith.constant 0 : index
    %20 = vector.load %arg8[%c0_17, %c0_18] : memref<128x512xf32, #tpu.memory_space<vmem>>, vector<128x512xf32>
    %cst_19 = arith.constant dense<0.000000e+00> : vector<128x512xf32>
    %21 = tpu.matmul %19, %20, %cst_19 {dimension_numbers = #tpu.dot_dimension_numbers<[1], [0], [0], [1], [0, 0, 1, 1], [], []>} : vector<128x128xf32>, vector<128x512xf32>, vector<128x512xf32> -> vector<128x512xf32>
    %c0_20 = arith.constant 0 : index
    %c0_21 = arith.constant 0 : index
    %22 = vector.load %arg9[%c0_20, %c0_21] : memref<1x512xf32, #tpu.memory_space<vmem>>, vector<1x512xf32>
    %23 = vector.broadcast %22 : vector<1x512xf32> to vector<128x512xf32>
    %24 = arith.addf %21, %23 : vector<128x512xf32>
    %cst_22 = arith.constant 0.000000e+00 : f32
    %25 = vector.broadcast %cst_22 : f32 to vector<128x512xf32>
    %26 = arith.maximumf %24, %25 : vector<128x512xf32>
    %c0_23 = arith.constant 0 : index
    %c0_24 = arith.constant 0 : index
    %27 = vector.load %arg10[%c0_23, %c0_24] : memref<512x128xf32, #tpu.memory_space<vmem>>, vector<512x128xf32>
    %cst_25 = arith.constant dense<0.000000e+00> : vector<128x128xf32>
    %28 = tpu.matmul %26, %27, %cst_25 {dimension_numbers = #tpu.dot_dimension_numbers<[1], [0], [0], [1], [0, 0, 1, 1], [], []>} : vector<128x512xf32>, vector<512x128xf32>, vector<128x128xf32> -> vector<128x128xf32>
    %c0_26 = arith.constant 0 : index
    %c0_27 = arith.constant 0 : index
    %29 = vector.load %arg11[%c0_26, %c0_27] : memref<1x128xf32, #tpu.memory_space<vmem>>, vector<1x128xf32>
    %30 = vector.broadcast %29 : vector<1x128xf32> to vector<128x128xf32>
    %31 = arith.addf %28, %30 : vector<128x128xf32>
    %32 = tpu.transpose %31, [1, 0] : vector<128x128xf32> -> vector<128x128xf32>
    %c0_28 = arith.constant 0 : index
    %c0_29 = arith.constant 0 : index
    %33 = vector.load %arg12[%c0_28, %c0_29] : memref<128x1xf32, #tpu.memory_space<vmem>>, vector<128x1xf32>
    %34 = vector.broadcast %33 : vector<128x1xf32> to vector<128x128xf32>
    %35 = arith.mulf %32, %34 : vector<128x128xf32>
    %cst_30 = arith.constant dense<0.000000e+00> : vector<128xf32>
    %36 = vector.multi_reduction <add>, %35, %cst_30 [0] : vector<128x128xf32> to vector<128xf32>
    %37 = vector.shape_cast %36 : vector<128xf32> to vector<1x128xf32>
    %c0_31 = arith.constant 0 : index
    %c0_32 = arith.constant 0 : index
    %38 = vector.load %arg13[%c0_31, %c0_32] : memref<1x1xf32, #tpu.memory_space<vmem>>, vector<1x1xf32>
    %39 = vector.broadcast %38 : vector<1x1xf32> to vector<1x128xf32>
    %40 = arith.addf %37, %39 : vector<1x128xf32>
    %41 = arith.negf %40 : vector<1x128xf32>
    %42 = math.exp %41 : vector<1x128xf32>
    %cst_33 = arith.constant 1.000000e+00 : f32
    %43 = vector.broadcast %cst_33 : f32 to vector<1x128xf32>
    %44 = arith.addf %43, %42 : vector<1x128xf32>
    %45 = arith.divf %43, %44 : vector<1x128xf32>
    %c0_34 = arith.constant 0 : index
    %c0_35 = arith.constant 0 : index
    %46 = vector.load %arg14[%c0_34, %c0_35] : memref<1x128xf32, #tpu.memory_space<vmem>>, vector<1x128xf32>
    tpu.vector_store %arg14[%c0_34, %c0_35], %45 {strides = array<i32>} : memref<1x128xf32, #tpu.memory_space<vmem>>, vector<1x128xf32>,
    return
  }
  func.func @transform_0(%arg0: i32) -> (i32, i32) {
    %c0_i32 = arith.constant 0 : i32
    %c0_i32_0 = arith.constant 0 : i32
    return %arg0, %c0_i32 : i32, i32
  }
  func.func @transform_1(%arg0: i32) -> (i32, i32) {
    %c0_i32 = arith.constant 0 : i32
    %c0_i32_0 = arith.constant 0 : i32
    %c0_i32_1 = arith.constant 0 : i32
    return %c0_i32, %c0_i32_0 : i32, i32
  }
  func.func @transform_2(%arg0: i32) -> (i32, i32) {
    %c0_i32 = arith.constant 0 : i32
    %c0_i32_0 = arith.constant 0 : i32
    %c0_i32_1 = arith.constant 0 : i32
    return %c0_i32, %c0_i32_0 : i32, i32
  }
  func.func @transform_3(%arg0: i32) -> (i32, i32) {
    %c0_i32 = arith.constant 0 : i32
    %c0_i32_0 = arith.constant 0 : i32
    %c0_i32_1 = arith.constant 0 : i32
    return %c0_i32, %c0_i32_0 : i32, i32
  }
  func.func @transform_4(%arg0: i32) -> (i32, i32) {
    %c0_i32 = arith.constant 0 : i32
    %c0_i32_0 = arith.constant 0 : i32
    %c0_i32_1 = arith.constant 0 : i32
    return %c0_i32, %c0_i32_0 : i32, i32
  }
  func.func @transform_5(%arg0: i32) -> (i32, i32) {
    %c0_i32 = arith.constant 0 : i32
    %c0_i32_0 = arith.constant 0 : i32
    %c0_i32_1 = arith.constant 0 : i32
    return %c0_i32, %c0_i32_0 : i32, i32
  }
  func.func @transform_6(%arg0: i32) -> (i32, i32) {
    %c0_i32 = arith.constant 0 : i32
    %c0_i32_0 = arith.constant 0 : i32
    %c0_i32_1 = arith.constant 0 : i32
    return %c0_i32, %c0_i32_0 : i32, i32
  }
  func.func @transform_7(%arg0: i32) -> (i32, i32) {
    %c0_i32 = arith.constant 0 : i32
    %c0_i32_0 = arith.constant 0 : i32
    %c0_i32_1 = arith.constant 0 : i32
    return %c0_i32, %c0_i32_0 : i32, i32
  }
  func.func @transform_8(%arg0: i32) -> (i32, i32) {
    %c0_i32 = arith.constant 0 : i32
    %c0_i32_0 = arith.constant 0 : i32
    %c0_i32_1 = arith.constant 0 : i32
    return %c0_i32, %c0_i32_0 : i32, i32
  }
  func.func @transform_9(%arg0: i32) -> (i32, i32) {
    %c0_i32 = arith.constant 0 : i32
    %c0_i32_0 = arith.constant 0 : i32
    %c0_i32_1 = arith.constant 0 : i32
    return %c0_i32, %c0_i32_0 : i32, i32
  }
  func.func @transform_10(%arg0: i32) -> (i32, i32) {
    %c0_i32 = arith.constant 0 : i32
    %c0_i32_0 = arith.constant 0 : i32
    %c0_i32_1 = arith.constant 0 : i32
    return %c0_i32, %c0_i32_0 : i32, i32
  }
  func.func @transform_11(%arg0: i32) -> (i32, i32) {
    %c0_i32 = arith.constant 0 : i32
    %c0_i32_0 = arith.constant 0 : i32
    %c0_i32_1 = arith.constant 0 : i32
    return %c0_i32, %c0_i32_0 : i32, i32
  }
  func.func @transform_12(%arg0: i32) -> (i32, i32) {
    %c0_i32 = arith.constant 0 : i32
    %c0_i32_0 = arith.constant 0 : i32
    %c0_i32_1 = arith.constant 0 : i32
    return %c0_i32, %c0_i32_0 : i32, i32
  }
  func.func @transform_13(%arg0: i32) -> (i32, i32) {
    %c0_i32 = arith.constant 0 : i32
    %c0_i32_0 = arith.constant 0 : i32
    return %c0_i32, %arg0 : i32, i32
  }
}

</mosaic_0001>

<llo_original>
// kernel: tpu_custom_call.1
$region0: #{tpu_custom_call.1}
  #allocation0 [shape = 'u32[]', space=smem, size = 0x4, offset = 0x4, fixed_abs, tag = 'smem constant byte address 0x4 - core index']
  #allocation1 [shape = 'u32[72,128]{1,0:T(1,128)}', space=vmem, size = 0x9000, scoped, tag = 'internal scratch']
  #allocation2 [shape = 'f32[1,1]{1,0:T(1,128)S(1)}', space=vmem, size = 0x200, scoped, tag = 'scoped memory for tpu_custom_call.1']
  %s0 = inlined_call_operand.vmem [shape: f32[256,64], index: 0, kind: input, shape index: {}]
  %s1 = inlined_call_operand.vmem [shape: f32[64,128], index: 1, kind: input, shape index: {}]
  %s2 = inlined_call_operand.vmem [shape: f32[1,128], index: 2, kind: input, shape index: {}]
  %s3 = inlined_call_operand.hbm [shape: f32[128,512], index: 3, kind: input, shape index: {}]
  %s4 = inlined_call_operand.vmem [shape: f32[1,512], index: 4, kind: input, shape index: {}]
  %s5 = inlined_call_operand.hbm [shape: f32[512,128], index: 5, kind: input, shape index: {}]
  %s6 = inlined_call_operand.vmem [shape: f32[1,128], index: 6, kind: input, shape index: {}]
  %s7 = inlined_call_operand.hbm [shape: f32[128,512], index: 7, kind: input, shape index: {}]
  %s8 = inlined_call_operand.vmem [shape: f32[1,512], index: 8, kind: input, shape index: {}]
  %s9 = inlined_call_operand.hbm [shape: f32[512,128], index: 9, kind: input, shape index: {}]
  %s10 = inlined_call_operand.vmem [shape: f32[1,128], index: 10, kind: input, shape index: {}]
  %s11 = inlined_call_operand.vmem [shape: f32[128,1], index: 11, kind: input, shape index: {}]
  %s12 = inlined_call_operand.<no memory space> [shape: f32[1,1], index: 12, kind: input, shape index: {}]
  %s13 = inlined_call_operand.hbm [shape: f32[1,256], index: 13, kind: output, shape index: {}]
  %s14 = sld [smem:[#allocation0]]
  $region101: #{tpu_custom_call.1} parent=0
    _
  %s16 = ssub.s32 1, %s14
  %s17 = scalar_select 0, %s16, %s14
  %v18 = vstv %s12
  %19 = vst [vmem:[#allocation2] sm:$0x1] %v18
  $region1: #{tpu_custom_call.1} parent=0
    #allocation3 [shape = 'u8[262144]{0}', space=vmem, size = 0x40000, scoped, tag = 'input window, operand 3, single buffered']
    #allocation4 [shape = 's32[2]{0}', space=sflag, size = 0x8, scoped, tag = 'scoped memory for tpu_custom_call.1']
    #allocation5 [shape = 's32[2]{0}', space=sflag, size = 0x8, scoped, tag = 'scoped memory for tpu_custom_call.1']
    #allocation6 [shape = 'u8[262144]{0}', space=vmem, size = 0x40000, scoped, tag = 'input window, operand 5, single buffered']
    #allocation7 [shape = 's32[1]{0}', space=sflag, size = 0x4, scoped, tag = 'scoped memory for tpu_custom_call.1']
    #allocation8 [shape = 'u8[262144]{0}', space=vmem, size = 0x40000, scoped, tag = 'input window, operand 7, single buffered']
    #allocation9 [shape = 'u8[262144]{0}', space=vmem, size = 0x40000, scoped, tag = 'input window, operand 9, single buffered']
    #allocation10 [shape = 's32[1]{0}', space=sflag, size = 0x4, scoped, tag = 'scoped memory for tpu_custom_call.1']
    #allocation11 [shape = 'u8[1024]{0}', space=vmem, size = 0x400, scoped, tag = 'output window, operand 0']
    %20 = vsyncpa [#allocation4], 0
    %21 = vsyncpa [#allocation7], 0
    %22 = vsyncpa [#allocation10], 0
    %23 = vsyncpa [#allocation5], 0
    %s24 = scalar_lea.sflag [#allocation5], 1
    %25 = vsyncpa %s24, 0
    loop: start=0, step=1, limit=4
    $region2: #{tpu_custom_call.1} parent=1 // loop_pre_header
      _
    $region3: #{tpu_custom_call.1} parent=1 // loop_header
      %s27 = sphi 0, %s31
      %p28 = scmp.ge.s32.totalorder %s27, 4
      %s37 = sphi 0, %s39
      %s40 = sphi 0, %s37
      %s41 = sphi 0, %s40
      %s57 = sphi 0, %s41
      %s61 = sphi 0, %s61
      %s63 = sphi 0, %s61
      %s64 = sphi 0, %s63
      %s78 = sphi 0, %s64
      %s82 = sphi 0, %s82
      %s84 = sphi 0, %s82
      %s85 = sphi 0, %s84
      %s99 = sphi 0, %s85
      %s103 = sphi 0, %s103
      %s105 = sphi 0, %s103
      %s106 = sphi 0, %s105
      %s120 = sphi 0, %s106
      %s124 = sphi 0, %s124
      %s126 = sphi 0, %s124
      %s127 = sphi 0, %s126
      %s141 = sphi 0, %s127
      %s145 = sphi 0, %s145
      %s147 = sphi 0, %s145
      %s148 = sphi 0, %s147
      %s162 = sphi 0, %s148
      %s166 = sphi 0, %s166
      %s168 = sphi 0, %s166
      %s169 = sphi 0, %s168
      %s183 = sphi 0, %s169
      %s187 = sphi 0, %s187
      %s189 = sphi 0, %s187
      %s190 = sphi 0, %s189
      %s204 = sphi 0, %s190
      %s208 = sphi 0, %s208
      %s210 = sphi 0, %s208
      %s211 = sphi 0, %s210
      %s225 = sphi 0, %s211
      %s229 = sphi 0, %s229
      %s231 = sphi 0, %s229
      %s232 = sphi 0, %s231
      %s246 = sphi 0, %s232
      %s250 = sphi 0, %s250
      %s252 = sphi 0, %s250
      %s253 = sphi 0, %s252
      %s267 = sphi 0, %s253
      %s271 = sphi 0, %s271
      %s273 = sphi 0, %s271
      %s274 = sphi 0, %s273
      %s288 = sphi 0, %s274
      %s292 = sphi 0, %s292
      %s294 = sphi 0, %s292
      %s295 = sphi 0, %s294
      %s309 = sphi 0, %s295
      %s315 = sphi 0, %s317
      %s318 = sphi 0, %s315
      %s319 = sphi 0, %s318
      %s335 = sphi 0, %s319
    $region4: #{tpu_custom_call.1} parent=1 // loop_header_branch
      %30 = sbr.rel (%p28) target = $region8
    $region5: #{tpu_custom_call.1} parent=1 // loop_body
      %s32 = ssub.s32 %s27, 1
      %s33 = ssub.s32 %s27, 2
      %s34 = sadd.s32 %s27, 1
      %s35 = ssub.s32 %s27, %s34
      %p36 = scmp.eq.s32.totalorder %s35, 0
      %s38 = sadd.s32 %s37, 1
      %s39 = scalar_select %p36, %s37, %s38
      %p42 = pneg %p36
      %p43 = scmp.eq.s32.totalorder %s27, 1
      %p44 = por %p42, %p43
      %p45 = scmp.ne.s32.totalorder %s37, %s40
      %p46 = scmp.eq.s32.totalorder %s27, 0
      %p47 = por %p45, %p46
      %p48 = scmp.ne.s32.totalorder %s37, %s40
      %p49 = scmp.eq.s32.totalorder %s32, 1
      %p50 = por %p48, %p49
      %p51 = scmp.ne.s32.totalorder %s40, %s41
      %p52 = scmp.eq.s32.totalorder %s32, 0
      %p53 = por %p51, %p52
      %p54 = scmp.ne.s32.totalorder %s40, %s41
      %p55 = scmp.eq.s32.totalorder %s33, 1
      %p56 = por %p54, %p55
      %p58 = scmp.ne.s32.totalorder %s41, %s57
      %p59 = scmp.eq.s32.totalorder %s33, 0
      %p60 = por %p58, %p59
      %s62 = sadd.s32 %s61, 1
      %p65 = scmp.eq.s32.totalorder %s27, 1
      %p66 = scmp.ne.s32.totalorder %s61, %s63
      %p67 = scmp.eq.s32.totalorder %s27, 0
      %p68 = por %p66, %p67
      %p69 = scmp.ne.s32.totalorder %s61, %s63
      %p70 = scmp.eq.s32.totalorder %s32, 1
      %p71 = por %p69, %p70
      %p72 = scmp.ne.s32.totalorder %s63, %s64
      %p73 = scmp.eq.s32.totalorder %s32, 0
      %p74 = por %p72, %p73
      %p75 = scmp.ne.s32.totalorder %s63, %s64
      %p76 = scmp.eq.s32.totalorder %s33, 1
      %p77 = por %p75, %p76
      %p79 = scmp.ne.s32.totalorder %s64, %s78
      %p80 = scmp.eq.s32.totalorder %s33, 0
      %p81 = por %p79, %p80
      %s83 = sadd.s32 %s82, 1
      %p86 = scmp.eq.s32.totalorder %s27, 1
      %p87 = scmp.ne.s32.totalorder %s82, %s84
      %p88 = scmp.eq.s32.totalorder %s27, 0
      %p89 = por %p87, %p88
      %p90 = scmp.ne.s32.totalorder %s82, %s84
      %p91 = scmp.eq.s32.totalorder %s32, 1
      %p92 = por %p90, %p91
      %p93 = scmp.ne.s32.totalorder %s84, %s85
      %p94 = scmp.eq.s32.totalorder %s32, 0
      %p95 = por %p93, %p94
      %p96 = scmp.ne.s32.totalorder %s84, %s85
      %p97 = scmp.eq.s32.totalorder %s33, 1
      %p98 = por %p96, %p97
      %p100 = scmp.ne.s32.totalorder %s85, %s99
      %p101 = scmp.eq.s32.totalorder %s33, 0
      %p102 = por %p100, %p101
      %s104 = sadd.s32 %s103, 1
      %p107 = scmp.eq.s32.totalorder %s27, 1
      %p108 = scmp.ne.s32.totalorder %s103, %s105
      %p109 = scmp.eq.s32.totalorder %s27, 0
      %p110 = por %p108, %p109
      %p111 = scmp.ne.s32.totalorder %s103, %s105
      %p112 = scmp.eq.s32.totalorder %s32, 1
      %p113 = por %p111, %p112
      %p114 = scmp.ne.s32.totalorder %s105, %s106
      %p115 = scmp.eq.s32.totalorder %s32, 0
      %p116 = por %p114, %p115
      %p117 = scmp.ne.s32.totalorder %s105, %s106
      %p118 = scmp.eq.s32.totalorder %s33, 1
      %p119 = por %p117, %p118
      %p121 = scmp.ne.s32.totalorder %s106, %s120
      %p122 = scmp.eq.s32.totalorder %s33, 0
      %p123 = por %p121, %p122
      %s125 = sadd.s32 %s124, 1
      %p128 = scmp.eq.s32.totalorder %s27, 1
      %p129 = scmp.ne.s32.totalorder %s124, %s126
      %p130 = scmp.eq.s32.totalorder %s27, 0
      %p131 = por %p129, %p130
      %p132 = scmp.ne.s32.totalorder %s124, %s126
      %p133 = scmp.eq.s32.totalorder %s32, 1
      %p134 = por %p132, %p133
      %p135 = scmp.ne.s32.totalorder %s126, %s127
      %p136 = scmp.eq.s32.totalorder %s32, 0
      %p137 = por %p135, %p136
      %p138 = scmp.ne.s32.totalorder %s126, %s127
      %p139 = scmp.eq.s32.totalorder %s33, 1
      %p140 = por %p138, %p139
      %p142 = scmp.ne.s32.totalorder %s127, %s141
      %p143 = scmp.eq.s32.totalorder %s33, 0
      %p144 = por %p142, %p143
      %s146 = sadd.s32 %s145, 1
      %p149 = scmp.eq.s32.totalorder %s27, 1
      %p150 = scmp.ne.s32.totalorder %s145, %s147
      %p151 = scmp.eq.s32.totalorder %s27, 0
      %p152 = por %p150, %p151
      %p153 = scmp.ne.s32.totalorder %s145, %s147
      %p154 = scmp.eq.s32.totalorder %s32, 1
      %p155 = por %p153, %p154
      %p156 = scmp.ne.s32.totalorder %s147, %s148
      %p157 = scmp.eq.s32.totalorder %s32, 0
      %p158 = por %p156, %p157
      %p159 = scmp.ne.s32.totalorder %s147, %s148
      %p160 = scmp.eq.s32.totalorder %s33, 1
      %p161 = por %p159, %p160
      %p163 = scmp.ne.s32.totalorder %s148, %s162
      %p164 = scmp.eq.s32.totalorder %s33, 0
      %p165 = por %p163, %p164
      %s167 = sadd.s32 %s166, 1
      %p170 = scmp.eq.s32.totalorder %s27, 1
      %p171 = scmp.ne.s32.totalorder %s166, %s168
      %p172 = scmp.eq.s32.totalorder %s27, 0
      %p173 = por %p171, %p172
      %p174 = scmp.ne.s32.totalorder %s166, %s168
      %p175 = scmp.eq.s32.totalorder %s32, 1
      %p176 = por %p174, %p175
      %p177 = scmp.ne.s32.totalorder %s168, %s169
      %p178 = scmp.eq.s32.totalorder %s32, 0
      %p179 = por %p177, %p178
      %p180 = scmp.ne.s32.totalorder %s168, %s169
      %p181 = scmp.eq.s32.totalorder %s33, 1
      %p182 = por %p180, %p181
      %p184 = scmp.ne.s32.totalorder %s169, %s183
      %p185 = scmp.eq.s32.totalorder %s33, 0
      %p186 = por %p184, %p185
      %s188 = sadd.s32 %s187, 1
      %p191 = scmp.eq.s32.totalorder %s27, 1
      %p192 = scmp.ne.s32.totalorder %s187, %s189
      %p193 = scmp.eq.s32.totalorder %s27, 0
      %p194 = por %p192, %p193
      %p195 = scmp.ne.s32.totalorder %s187, %s189
      %p196 = scmp.eq.s32.totalorder %s32, 1
      %p197 = por %p195, %p196
      %p198 = scmp.ne.s32.totalorder %s189, %s190
      %p199 = scmp.eq.s32.totalorder %s32, 0
      %p200 = por %p198, %p199
      %p201 = scmp.ne.s32.totalorder %s189, %s190
      %p202 = scmp.eq.s32.totalorder %s33, 1
      %p203 = por %p201, %p202
      %p205 = scmp.ne.s32.totalorder %s190, %s204
      %p206 = scmp.eq.s32.totalorder %s33, 0
      %p207 = por %p205, %p206
      %s209 = sadd.s32 %s208, 1
      %p212 = scmp.eq.s32.totalorder %s27, 1
      %p213 = scmp.ne.s32.totalorder %s208, %s210
      %p214 = scmp.eq.s32.totalorder %s27, 0
      %p215 = por %p213, %p214
      %p216 = scmp.ne.s32.totalorder %s208, %s210
      %p217 = scmp.eq.s32.totalorder %s32, 1
      %p218 = por %p216, %p217
      %p219 = scmp.ne.s32.totalorder %s210, %s211
      %p220 = scmp.eq.s32.totalorder %s32, 0
      %p221 = por %p219, %p220
      %p222 = scmp.ne.s32.totalorder %s210, %s211
      %p223 = scmp.eq.s32.totalorder %s33, 1
      %p224 = por %p222, %p223
      %p226 = scmp.ne.s32.totalorder %s211, %s225
      %p227 = scmp.eq.s32.totalorder %s33, 0
      %p228 = por %p226, %p227
      %s230 = sadd.s32 %s229, 1
      %p233 = scmp.eq.s32.totalorder %s27, 1
      %p234 = scmp.ne.s32.totalorder %s229, %s231
      %p235 = scmp.eq.s32.totalorder %s27, 0
      %p236 = por %p234, %p235
      %p237 = scmp.ne.s32.totalorder %s229, %s231
      %p238 = scmp.eq.s32.totalorder %s32, 1
      %p239 = por %p237, %p238
      %p240 = scmp.ne.s32.totalorder %s231, %s232
      %p241 = scmp.eq.s32.totalorder %s32, 0
      %p242 = por %p240, %p241
      %p243 = scmp.ne.s32.totalorder %s231, %s232
      %p244 = scmp.eq.s32.totalorder %s33, 1
      %p245 = por %p243, %p244
      %p247 = scmp.ne.s32.totalorder %s232, %s246
      %p248 = scmp.eq.s32.totalorder %s33, 0
      %p249 = por %p247, %p248
      %s251 = sadd.s32 %s250, 1
      %p254 = scmp.eq.s32.totalorder %s27, 1
      %p255 = scmp.ne.s32.totalorder %s250, %s252
      %p256 = scmp.eq.s32.totalorder %s27, 0
      %p257 = por %p255, %p256
      %p258 = scmp.ne.s32.totalorder %s250, %s252
      %p259 = scmp.eq.s32.totalorder %s32, 1
      %p260 = por %p258, %p259
      %p261 = scmp.ne.s32.totalorder %s252, %s253
      %p262 = scmp.eq.s32.totalorder %s32, 0
      %p263 = por %p261, %p262
      %p264 = scmp.ne.s32.totalorder %s252, %s253
      %p265 = scmp.eq.s32.totalorder %s33, 1
      %p266 = por %p264, %p265
      %p268 = scmp.ne.s32.totalorder %s253, %s267
      %p269 = scmp.eq.s32.totalorder %s33, 0
      %p270 = por %p268, %p269
      %s272 = sadd.s32 %s271, 1
      %p275 = scmp.eq.s32.totalorder %s27, 1
      %p276 = scmp.ne.s32.totalorder %s271, %s273
      %p277 = scmp.eq.s32.totalorder %s27, 0
      %p278 = por %p276, %p277
      %p279 = scmp.ne.s32.totalorder %s271, %s273
      %p280 = scmp.eq.s32.totalorder %s32, 1
      %p281 = por %p279, %p280
      %p282 = scmp.ne.s32.totalorder %s273, %s274
      %p283 = scmp.eq.s32.totalorder %s32, 0
      %p284 = por %p282, %p283
      %p285 = scmp.ne.s32.totalorder %s273, %s274
      %p286 = scmp.eq.s32.totalorder %s33, 1
      %p287 = por %p285, %p286
      %p289 = scmp.ne.s32.totalorder %s274, %s288
      %p290 = scmp.eq.s32.totalorder %s33, 0
      %p291 = por %p289, %p290
      %s293 = sadd.s32 %s292, 1
      %p296 = scmp.eq.s32.totalorder %s27, 1
      %p297 = scmp.ne.s32.totalorder %s292, %s294
      %p298 = scmp.eq.s32.totalorder %s27, 0
      %p299 = por %p297, %p298
      %p300 = scmp.ne.s32.totalorder %s292, %s294
      %p301 = scmp.eq.s32.totalorder %s32, 1
      %p302 = por %p300, %p301
      %p303 = scmp.ne.s32.totalorder %s294, %s295
      %p304 = scmp.eq.s32.totalorder %s32, 0
      %p305 = por %p303, %p304
      %p306 = scmp.ne.s32.totalorder %s294, %s295
      %p307 = scmp.eq.s32.totalorder %s33, 1
      %p308 = por %p306, %p307
      %p310 = scmp.ne.s32.totalorder %s295, %s309
      %p311 = scmp.eq.s32.totalorder %s33, 0
      %p312 = por %p310, %p311
      %s313 = ssub.s32 %s27, %s34
      %p314 = scmp.eq.s32.totalorder %s313, 0
      %s316 = sadd.s32 %s315, 1
      %s317 = scalar_select %p314, %s315, %s316
      %p320 = pneg %p314
      %p321 = scmp.eq.s32.totalorder %s27, 1
      %p322 = por %p320, %p321
      %p323 = scmp.ne.s32.totalorder %s315, %s318
      %p324 = scmp.eq.s32.totalorder %s27, 0
      %p325 = por %p323, %p324
      %p326 = scmp.ne.s32.totalorder %s315, %s318
      %p327 = scmp.eq.s32.totalorder %s32, 1
      %p328 = por %p326, %p327
      %p329 = scmp.ne.s32.totalorder %s318, %s319
      %p330 = scmp.eq.s32.totalorder %s32, 0
      %p331 = por %p329, %p330
      %p332 = scmp.ne.s32.totalorder %s318, %s319
      %p333 = scmp.eq.s32.totalorder %s33, 1
      %p334 = por %p332, %p333
      %p336 = scmp.ne.s32.totalorder %s319, %s335
      %p337 = scmp.eq.s32.totalorder %s33, 0
      %p338 = por %p336, %p337
      %p339 = scmp.le.s32.totalorder 1, %s27
      %p340 = scmp.lt.s32.totalorder %s27, 3
      %p341 = pnand %p339, %p340
      %p342 = pneg %p341
      // Predicated region
      $region9: #{tpu_custom_call.1} parent=5 // pred_check
        _
      $region10: #{tpu_custom_call.1} parent=5 // pred_check_branch
        %344 = sbr.rel (%p341) target = $region12
      $region11: #{tpu_custom_call.1} parent=5 // pred_region
        %s345 = ssub.s32 %s27, 1
        // Predicated region
        $region13: #{tpu_custom_call.1} parent=11 // pred_check
          %p346 = pneg %p74
        $region14: #{tpu_custom_call.1} parent=11 // pred_check_branch
          %348 = sbr.rel (%p346) target = $region16
        $region15: #{tpu_custom_call.1} parent=11 // pred_region
          _
        $region16: #{tpu_custom_call.1} parent=11 // pred_fallthru
          _
        // Predicated region
        $region17: #{tpu_custom_call.1} parent=11 // pred_check
          %p349 = pneg %p95
        $region18: #{tpu_custom_call.1} parent=11 // pred_check_branch
          %351 = sbr.rel (%p349) target = $region20
        $region19: #{tpu_custom_call.1} parent=11 // pred_region
          _
        $region20: #{tpu_custom_call.1} parent=11 // pred_fallthru
          _
        // Predicated region
        $region21: #{tpu_custom_call.1} parent=11 // pred_check
          %p352 = pneg %p116
        $region22: #{tpu_custom_call.1} parent=11 // pred_check_branch
          %354 = sbr.rel (%p352) target = $region24
        $region23: #{tpu_custom_call.1} parent=11 // pred_region
          %356 = vsyncadd [#allocation4], 0
          %s357 = sshll.u32 %s3, 4
          %s358 = int_to_ptr.hbm [resolvable:$true] %s357
          %s359 = sshll.u32 [#allocation3], 4
          %s360 = int_to_ptr.vmem [resolvable:$true] %s359
          %365 = dma.hbm_to_vmem [thread:$0]  %s358, 8192, %s360, [#allocation4], 512, 512, 32
        $region24: #{tpu_custom_call.1} parent=11 // pred_fallthru
          _
        // Predicated region
        $region25: #{tpu_custom_call.1} parent=11 // pred_check
          %p366 = pneg %p137
        $region26: #{tpu_custom_call.1} parent=11 // pred_check_branch
          %368 = sbr.rel (%p366) target = $region28
        $region27: #{tpu_custom_call.1} parent=11 // pred_region
          _
        $region28: #{tpu_custom_call.1} parent=11 // pred_fallthru
          _
        // Predicated region
        $region29: #{tpu_custom_call.1} parent=11 // pred_check
          %p369 = pneg %p158
        $region30: #{tpu_custom_call.1} parent=11 // pred_check_branch
          %371 = sbr.rel (%p369) target = $region32
        $region31: #{tpu_custom_call.1} parent=11 // pred_region
          %373 = vsyncadd [#allocation7], 0
          %s374 = sshll.u32 %s5, 4
          %s375 = int_to_ptr.hbm [resolvable:$true] %s374
          %s376 = sshll.u32 [#allocation6], 4
          %s377 = int_to_ptr.vmem [resolvable:$true] %s376
          %382 = dma.hbm_to_vmem [thread:$0]  %s375, 8192, %s377, [#allocation7], 128, 128, 8
        $region32: #{tpu_custom_call.1} parent=11 // pred_fallthru
          _
        // Predicated region
        $region33: #{tpu_custom_call.1} parent=11 // pred_check
          %p383 = pneg %p179
        $region34: #{tpu_custom_call.1} parent=11 // pred_check_branch
          %385 = sbr.rel (%p383) target = $region36
        $region35: #{tpu_custom_call.1} parent=11 // pred_region
          _
        $region36: #{tpu_custom_call.1} parent=11 // pred_fallthru
          _
        // Predicated region
        $region37: #{tpu_custom_call.1} parent=11 // pred_check
          %p386 = pneg %p200
        $region38: #{tpu_custom_call.1} parent=11 // pred_check_branch
          %388 = sbr.rel (%p386) target = $region40
        $region39: #{tpu_custom_call.1} parent=11 // pred_region
          %390 = vsyncadd [#allocation7], 0
          %s391 = sshll.u32 %s7, 4
          %s392 = int_to_ptr.hbm [resolvable:$true] %s391
          %s393 = sshll.u32 [#allocation8], 4
          %s394 = int_to_ptr.vmem [resolvable:$true] %s393
          %399 = dma.hbm_to_vmem [thread:$0]  %s392, 8192, %s394, [#allocation7], 512, 512, 32
        $region40: #{tpu_custom_call.1} parent=11 // pred_fallthru
          _
        // Predicated region
        $region41: #{tpu_custom_call.1} parent=11 // pred_check
          %p400 = pneg %p221
        $region42: #{tpu_custom_call.1} parent=11 // pred_check_branch
          %402 = sbr.rel (%p400) target = $region44
        $region43: #{tpu_custom_call.1} parent=11 // pred_region
          _
        $region44: #{tpu_custom_call.1} parent=11 // pred_fallthru
          _
        // Predicated region
        $region45: #{tpu_custom_call.1} parent=11 // pred_check
          %p403 = pneg %p242
        $region46: #{tpu_custom_call.1} parent=11 // pred_check_branch
          %405 = sbr.rel (%p403) target = $region48
        $region47: #{tpu_custom_call.1} parent=11 // pred_region
          %407 = vsyncadd [#allocation10], 0
          %s408 = sshll.u32 %s9, 4
          %s409 = int_to_ptr.hbm [resolvable:$true] %s408
          %s410 = sshll.u32 [#allocation9], 4
          %s411 = int_to_ptr.vmem [resolvable:$true] %s410
          %416 = dma.hbm_to_vmem [thread:$0]  %s409, 8192, %s411, [#allocation10], 128, 128, 8
        $region48: #{tpu_custom_call.1} parent=11 // pred_fallthru
          _
        // Predicated region
        $region49: #{tpu_custom_call.1} parent=11 // pred_check
          %p417 = pneg %p263
        $region50: #{tpu_custom_call.1} parent=11 // pred_check_branch
          %419 = sbr.rel (%p417) target = $region52
        $region51: #{tpu_custom_call.1} parent=11 // pred_region
          _
        $region52: #{tpu_custom_call.1} parent=11 // pred_fallthru
          _
        // Predicated region
        $region53: #{tpu_custom_call.1} parent=11 // pred_check
          %p420 = pneg %p284
        $region54: #{tpu_custom_call.1} parent=11 // pred_check_branch
          %422 = sbr.rel (%p420) target = $region56
        $region55: #{tpu_custom_call.1} parent=11 // pred_region
          _
        $region56: #{tpu_custom_call.1} parent=11 // pred_fallthru
          _
        // Predicated region
        $region57: #{tpu_custom_call.1} parent=11 // pred_check
          %p423 = pneg %p305
        $region58: #{tpu_custom_call.1} parent=11 // pred_check_branch
          %425 = sbr.rel (%p423) target = $region60
        $region59: #{tpu_custom_call.1} parent=11 // pred_region
          _
        $region60: #{tpu_custom_call.1} parent=11 // pred_fallthru
          _
      $region12: #{tpu_custom_call.1} parent=5 // pred_fallthru
        _
      %p426 = scmp.lt.s32.totalorder %s27, 2
      // Predicated region
      $region61: #{tpu_custom_call.1} parent=5 // pred_check
        %p427 = pneg %p426
      $region62: #{tpu_custom_call.1} parent=5 // pred_check_branch
        %429 = sbr.rel (%p427) target = $region64
      $region63: #{tpu_custom_call.1} parent=5 // pred_region
        // Predicated region
        $region65: #{tpu_custom_call.1} parent=63 // pred_check
          %p430 = pneg %p47
        $region66: #{tpu_custom_call.1} parent=63 // pred_check_branch
          %432 = sbr.rel (%p430) target = $region68
        $region67: #{tpu_custom_call.1} parent=63 // pred_region
          %s433 = smul.u32 16, %s27
          %p434 = scmp.lt.s32.totalorder %s433, 31
          %s435 = scalar_select %p434, %s433, 31
          %s436 = smul.addr %s435, 8
          %s437 = scalar_lea.vmem %s0, %s436
          %s438 = smul.u32 16, %s27
        $region68: #{tpu_custom_call.1} parent=63 // pred_fallthru
          _
      $region64: #{tpu_custom_call.1} parent=5 // pred_fallthru
        _
      %p439 = scmp.le.s32.totalorder 1, %s27
      %p440 = scmp.lt.s32.totalorder %s27, 3
      %p441 = pnand %p439, %p440
      %p442 = pneg %p441
      // Predicated region
      $region69: #{tpu_custom_call.1} parent=5 // pred_check
        _
      $region70: #{tpu_custom_call.1} parent=5 // pred_check_branch
        %444 = sbr.rel (%p441) target = $region72
      $region71: #{tpu_custom_call.1} parent=5 // pred_region
        %s445 = ssub.s32 %s27, 1
        // Predicated region
        $region73: #{tpu_custom_call.1} parent=71 // pred_check
          %p446 = pneg %p116
        $region74: #{tpu_custom_call.1} parent=71 // pred_check_branch
          %448 = sbr.rel (%p446) target = $region76
        $region75: #{tpu_custom_call.1} parent=71 // pred_region
          %450 = dma.done [#allocation4], 8192
        $region76: #{tpu_custom_call.1} parent=71 // pred_fallthru
          _
        // Predicated region
        $region77: #{tpu_custom_call.1} parent=71 // pred_check
          %p451 = pneg %p158
        $region78: #{tpu_custom_call.1} parent=71 // pred_check_branch
          %453 = sbr.rel (%p451) target = $region80
        $region79: #{tpu_custom_call.1} parent=71 // pred_region
          %455 = dma.done [#allocation7], 8192
        $region80: #{tpu_custom_call.1} parent=71 // pred_fallthru
          _
        // Predicated region
        $region81: #{tpu_custom_call.1} parent=71 // pred_check
          %p456 = pneg %p200
        $region82: #{tpu_custom_call.1} parent=71 // pred_check_branch
          %458 = sbr.rel (%p456) target = $region84
        $region83: #{tpu_custom_call.1} parent=71 // pred_region
          %460 = dma.done [#allocation7], 8192
        $region84: #{tpu_custom_call.1} parent=71 // pred_fallthru
          _
        // Predicated region
        $region85: #{tpu_custom_call.1} parent=71 // pred_check
          %p461 = pneg %p242
        $region86: #{tpu_custom_call.1} parent=71 // pred_check_branch
          %463 = sbr.rel (%p461) target = $region88
        $region87: #{tpu_custom_call.1} parent=71 // pred_region
          %465 = dma.done [#allocation10], 8192
        $region88: #{tpu_custom_call.1} parent=71 // pred_fallthru
          _
        %s466 = smul.u32 16, %s32
        %p467 = scmp.lt.s32.totalorder %s466, 31
        %s468 = scalar_select %p467, %s466, 31
        %s469 = smul.addr %s468, 8
        %s470 = scalar_lea.vmem %s0, %s469
        %p471 = pneg %p53
        %p472 = pneg %p50
        %p473 = pneg %p74
        %p474 = pneg %p71
        %p475 = pneg %p95
        %p476 = pneg %p92
        %p477 = pneg %p116
        %p478 = pneg %p113
        %p479 = pneg %p137
        %p480 = pneg %p134
        %p481 = pneg %p158
        %p482 = pneg %p155
        %p483 = pneg %p179
        %p484 = pneg %p176
        %p485 = pneg %p200
        %p486 = pneg %p197
        %p487 = pneg %p221
        %p488 = pneg %p218
        %p489 = pneg %p242
        %p490 = pneg %p239
        %p491 = pneg %p263
        %p492 = pneg %p260
        %p493 = pneg %p284
        %p494 = pneg %p281
        %p495 = pneg %p305
        %p496 = pneg %p302
        %p497 = pneg %p331
        %p498 = pneg %p328
        %s499 = sand.u32 %s318, 1
        %s500 = scalar_lea.sflag [#allocation5], %s499
        %s501 = sand.u32 %s318, 1
        %s502 = scalar_lea.vmem [#allocation11], %s501
        %s503 = smul.u32 16, %s32
        %p504 = scmp.lt.s32.totalorder %s503, 31
        %s505 = scalar_select %p504, %s503, 31
        %s506 = smul.addr %s505, 8
        %s507 = scalar_lea.vmem %s0, %s506
        %s508 = smul.u32 16, %s32
        %v509 = vld [vmem:[%s507] sm:$0xff]
        %v510 = vld [vmem:[%s507 + $0x8] sm:$0xff]
        %v511 = vld [vmem:[%s507 + $0x10] sm:$0xff]
        %v512 = vld [vmem:[%s507 + $0x18] sm:$0xff]
        %v513 = vld [vmem:[%s507 + $0x20] sm:$0xff]
        %v514 = vld [vmem:[%s507 + $0x28] sm:$0xff]
        %v515 = vld [vmem:[%s507 + $0x30] sm:$0xff]
        %v516 = vld [vmem:[%s507 + $0x38] sm:$0xff]
        %v517 = vld [vmem:[%s507 + $0x40] sm:$0xff]
        %v518 = vld [vmem:[%s507 + $0x48] sm:$0xff]
        %v519 = vld [vmem:[%s507 + $0x50] sm:$0xff]
        %v520 = vld [vmem:[%s507 + $0x58] sm:$0xff]
        %v521 = vld [vmem:[%s507 + $0x60] sm:$0xff]
        %v522 = vld [vmem:[%s507 + $0x68] sm:$0xff]
        %v523 = vld [vmem:[%s507 + $0x70] sm:$0xff]
        %v524 = vld [vmem:[%s507 + $0x78] sm:$0xff]
        %v525 = vld [vmem:[%s1] sm:$0xff]
        %v526 = vld [vmem:[%s1 + $0x8] sm:$0xff]
        %v527 = vld [vmem:[%s1 + $0x10] sm:$0xff]
        %v528 = vld [vmem:[%s1 + $0x18] sm:$0xff]
        %v529 = vld [vmem:[%s1 + $0x20] sm:$0xff]
        %v530 = vld [vmem:[%s1 + $0x28] sm:$0xff]
        %v531 = vld [vmem:[%s1 + $0x30] sm:$0xff]
        %v532 = vld [vmem:[%s1 + $0x38] sm:$0xff]
        %v533 = vld [vmem:[%s2] sm:$0x1]
        %v535 = vperm.slane %v533, 0
        %vm537 = vcmask 523264
        %v539 = vsel %vm537, %v509, 0
        %v542 = vsel %vm537, %v510, 0
        %v545 = vsel %vm537, %v511, 0
        %v548 = vsel %vm537, %v512, 0
        %v551 = vsel %vm537, %v513, 0
        %v554 = vsel %vm537, %v514, 0
        %v557 = vsel %vm537, %v515, 0
        %v560 = vsel %vm537, %v516, 0
        %v563 = vsel %vm537, %v517, 0
        %v566 = vsel %vm537, %v518, 0
        %v569 = vsel %vm537, %v519, 0
        %v572 = vsel %vm537, %v520, 0
        %v575 = vsel %vm537, %v521, 0
        %v578 = vsel %vm537, %v522, 0
        %v581 = vsel %vm537, %v523, 0
        %v584 = vsel %vm537, %v524, 0
        %586 = vmatpush.msra.mxu0 0.0
        %587 = vmatpush.msra.mxu0 0.0
        %588 = vmatpush.msra.mxu0 0.0
        %589 = vmatpush.msra.mxu0 0.0
        %590 = vmatpush.msra.mxu0 0.0
        %591 = vmatpush.msra.mxu0 0.0
        %592 = vmatpush.msra.mxu0 0.0
        %593 = vmatpush.msra.mxu0 0.0
        %594 = vmatpush.msra.mxu0 %v532
        %595 = vmatpush.msra.mxu0 %v531
        %596 = vmatpush.msra.mxu0 %v530
        %597 = vmatpush.msra.mxu0 %v529
        %598 = vmatpush.msra.mxu0 %v528
        %599 = vmatpush.msra.mxu0 %v527
        %600 = vmatpush.msra.mxu0 %v526
        %601 = vmatpush.msra.mxu0 %v525
        %602 = vmatmul.f32.gmra.mxu0 %v539
        %v603 = vpop.f32.mrf.mxu0
        %v604 = vadd.f32 %v535, %v603
        %605 = vmatmul.f32.gmra.mxu0 %v542
        %v606 = vpop.f32.mrf.mxu0
        %v607 = vadd.f32 %v535, %v606
        %608 = vmatmul.f32.gmra.mxu0 %v545
        %v609 = vpop.f32.mrf.mxu0
        %v610 = vadd.f32 %v535, %v609
        %611 = vmatmul.f32.gmra.mxu0 %v548
        %v612 = vpop.f32.mrf.mxu0
        %v613 = vadd.f32 %v535, %v612
        %614 = vmatmul.f32.gmra.mxu0 %v551
        %v615 = vpop.f32.mrf.mxu0
        %v616 = vadd.f32 %v535, %v615
        %617 = vmatmul.f32.gmra.mxu0 %v554
        %v618 = vpop.f32.mrf.mxu0
        %v619 = vadd.f32 %v535, %v618
        %620 = vmatmul.f32.gmra.mxu0 %v557
        %v621 = vpop.f32.mrf.mxu0
        %v622 = vadd.f32 %v535, %v621
        %623 = vmatmul.f32.gmra.mxu0 %v560
        %v624 = vpop.f32.mrf.mxu0
        %v625 = vadd.f32 %v535, %v624
        %626 = vmatmul.f32.gmra.mxu0 %v563
        %v627 = vpop.f32.mrf.mxu0
        %v628 = vadd.f32 %v535, %v627
        %629 = vmatmul.f32.gmra.mxu0 %v566
        %v630 = vpop.f32.mrf.mxu0
        %v631 = vadd.f32 %v535, %v630
        %632 = vmatmul.f32.gmra.mxu0 %v569
        %v633 = vpop.f32.mrf.mxu0
        %v634 = vadd.f32 %v535, %v633
        %635 = vmatmul.f32.gmra.mxu0 %v572
        %v636 = vpop.f32.mrf.mxu0
        %v637 = vadd.f32 %v535, %v636
        %638 = vmatmul.f32.gmra.mxu0 %v575
        %v639 = vpop.f32.mrf.mxu0
        %v640 = vadd.f32 %v535, %v639
        %641 = vmatmul.f32.gmra.mxu0 %v578
        %v642 = vpop.f32.mrf.mxu0
        %v643 = vadd.f32 %v535, %v642
        %644 = vmatmul.f32.gmra.mxu0 %v581
        %v645 = vpop.f32.mrf.mxu0
        %v646 = vadd.f32 %v535, %v645
        %647 = vmatmul.f32.gmra.mxu0 %v584
        %v648 = vpop.f32.mrf.mxu0
        %v649 = vadd.f32 %v535, %v648
        %650 = vdwg.mxu0
        %v651 = vld [vmem:[#allocation3] sm:$0xff]
        %v652 = vld [vmem:[#allocation3 + $0x8] sm:$0xff]
        %v653 = vld [vmem:[#allocation3 + $0x10] sm:$0xff]
        %v654 = vld [vmem:[#allocation3 + $0x18] sm:$0xff]
        %v655 = vld [vmem:[#allocation3 + $0x20] sm:$0xff]
        %v656 = vld [vmem:[#allocation3 + $0x28] sm:$0xff]
        %v657 = vld [vmem:[#allocation3 + $0x30] sm:$0xff]
        %v658 = vld [vmem:[#allocation3 + $0x38] sm:$0xff]
        %v659 = vld [vmem:[#allocation3 + $0x40] sm:$0xff]
        %v660 = vld [vmem:[#allocation3 + $0x48] sm:$0xff]
        %v661 = vld [vmem:[#allocation3 + $0x50] sm:$0xff]
        %v662 = vld [vmem:[#allocation3 + $0x58] sm:$0xff]
        %v663 = vld [vmem:[#allocation3 + $0x60] sm:$0xff]
        %v664 = vld [vmem:[#allocation3 + $0x68] sm:$0xff]
        %v665 = vld [vmem:[#allocation3 + $0x70] sm:$0xff]
        %v666 = vld [vmem:[#allocation3 + $0x78] sm:$0xff]
        %v667 = vld [vmem:[#allocation3 + $0x80] sm:$0xff]
        %v668 = vld [vmem:[#allocation3 + $0x88] sm:$0xff]
        %v669 = vld [vmem:[#allocation3 + $0x90] sm:$0xff]
        %v670 = vld [vmem:[#allocation3 + $0x98] sm:$0xff]
        %v671 = vld [vmem:[#allocation3 + $0xa0] sm:$0xff]
        %v672 = vld [vmem:[#allocation3 + $0xa8] sm:$0xff]
        %v673 = vld [vmem:[#allocation3 + $0xb0] sm:$0xff]
        %v674 = vld [vmem:[#allocation3 + $0xb8] sm:$0xff]
        %v675 = vld [vmem:[#allocation3 + $0xc0] sm:$0xff]
        %v676 = vld [vmem:[#allocation3 + $0xc8] sm:$0xff]
        %v677 = vld [vmem:[#allocation3 + $0xd0] sm:$0xff]
        %v678 = vld [vmem:[#allocation3 + $0xd8] sm:$0xff]
        %v679 = vld [vmem:[#allocation3 + $0xe0] sm:$0xff]
        %v680 = vld [vmem:[#allocation3 + $0xe8] sm:$0xff]
        %v681 = vld [vmem:[#allocation3 + $0xf0] sm:$0xff]
        %v682 = vld [vmem:[#allocation3 + $0xf8] sm:$0xff]
        %v683 = vld [vmem:[#allocation3 + $0x100] sm:$0xff]
        %v684 = vld [vmem:[#allocation3 + $0x108] sm:$0xff]
        %v685 = vld [vmem:[#allocation3 + $0x110] sm:$0xff]
        %v686 = vld [vmem:[#allocation3 + $0x118] sm:$0xff]
        %v687 = vld [vmem:[#allocation3 + $0x120] sm:$0xff]
        %v688 = vld [vmem:[#allocation3 + $0x128] sm:$0xff]
        %v689 = vld [vmem:[#allocation3 + $0x130] sm:$0xff]
        %v690 = vld [vmem:[#allocation3 + $0x138] sm:$0xff]
        %v691 = vld [vmem:[#allocation3 + $0x140] sm:$0xff]
        %v692 = vld [vmem:[#allocation3 + $0x148] sm:$0xff]
        %v693 = vld [vmem:[#allocation3 + $0x150] sm:$0xff]
        %v694 = vld [vmem:[#allocation3 + $0x158] sm:$0xff]
        %v695 = vld [vmem:[#allocation3 + $0x160] sm:$0xff]
        %v696 = vld [vmem:[#allocation3 + $0x168] sm:$0xff]
        %v697 = vld [vmem:[#allocation3 + $0x170] sm:$0xff]
        %v698 = vld [vmem:[#allocation3 + $0x178] sm:$0xff]
        %v699 = vld [vmem:[#allocation3 + $0x180] sm:$0xff]
        %v700 = vld [vmem:[#allocation3 + $0x188] sm:$0xff]
        %v701 = vld [vmem:[#allocation3 + $0x190] sm:$0xff]
        %v702 = vld [vmem:[#allocation3 + $0x198] sm:$0xff]
        %v703 = vld [vmem:[#allocation3 + $0x1a0] sm:$0xff]
        %v704 = vld [vmem:[#allocation3 + $0x1a8] sm:$0xff]
        %v705 = vld [vmem:[#allocation3 + $0x1b0] sm:$0xff]
        %v706 = vld [vmem:[#allocation3 + $0x1b8] sm:$0xff]
        %v707 = vld [vmem:[#allocation3 + $0x1c0] sm:$0xff]
        %v708 = vld [vmem:[#allocation3 + $0x1c8] sm:$0xff]
        %v709 = vld [vmem:[#allocation3 + $0x1d0] sm:$0xff]
        %v710 = vld [vmem:[#allocation3 + $0x1d8] sm:$0xff]
        %v711 = vld [vmem:[#allocation3 + $0x1e0] sm:$0xff]
        %v712 = vld [vmem:[#allocation3 + $0x1e8] sm:$0xff]
        %v713 = vld [vmem:[#allocation3 + $0x1f0] sm:$0xff]
        %v714 = vld [vmem:[#allocation3 + $0x1f8] sm:$0xff]
        %v715 = vld [vmem:[%s4] sm:$0xf]
        %v717 = vperm.slane %v715, 0
        %v718 = vperm.slane %v715, 1
        %v719 = vperm.slane %v715, 2
        %v720 = vperm.slane %v715, 3
        %725 = vmatpush.msra.mxu0 %v711
        %726 = vmatpush.msra.mxu0 %v707
        %727 = vmatpush.msra.mxu0 %v703
        %728 = vmatpush.msra.mxu0 %v699
        %729 = vmatpush.msra.mxu0 %v695
        %730 = vmatpush.msra.mxu0 %v691
        %731 = vmatpush.msra.mxu0 %v687
        %732 = vmatpush.msra.mxu0 %v683
        %733 = vmatpush.msra.mxu0 %v679
        %734 = vmatpush.msra.mxu0 %v675
        %735 = vmatpush.msra.mxu0 %v671
        %736 = vmatpush.msra.mxu0 %v667
        %737 = vmatpush.msra.mxu0 %v663
        %738 = vmatpush.msra.mxu0 %v659
        %739 = vmatpush.msra.mxu0 %v655
        %740 = vmatpush.msra.mxu0 %v651
        %741 = vmatmul.f32.gmra.mxu0 %v604
        %v742 = vpop.f32.mrf.mxu0
        %v743 = vadd.f32 %v717, %v742
        %744 = vmatmul.f32.gmra.mxu0 %v607
        %v745 = vpop.f32.mrf.mxu0
        %v746 = vadd.f32 %v717, %v745
        %747 = vmatmul.f32.gmra.mxu0 %v610
        %v748 = vpop.f32.mrf.mxu0
        %v749 = vadd.f32 %v717, %v748
        %750 = vmatmul.f32.gmra.mxu0 %v613
        %v751 = vpop.f32.mrf.mxu0
        %v752 = vadd.f32 %v717, %v751
        %753 = vmatmul.f32.gmra.mxu0 %v616
        %v754 = vpop.f32.mrf.mxu0
        %v755 = vadd.f32 %v717, %v754
        %756 = vmatmul.f32.gmra.mxu0 %v619
        %v757 = vpop.f32.mrf.mxu0
        %v758 = vadd.f32 %v717, %v757
        %759 = vmatmul.f32.gmra.mxu0 %v622
        %v760 = vpop.f32.mrf.mxu0
        %v761 = vadd.f32 %v717, %v760
        %762 = vmatmul.f32.gmra.mxu0 %v625
        %v763 = vpop.f32.mrf.mxu0
        %v764 = vadd.f32 %v717, %v763
        %765 = vmatmul.f32.gmra.mxu0 %v628
        %v766 = vpop.f32.mrf.mxu0
        %v767 = vadd.f32 %v717, %v766
        %768 = vmatmul.f32.gmra.mxu0 %v631
        %v769 = vpop.f32.mrf.mxu0
        %v770 = vadd.f32 %v717, %v769
        %771 = vmatmul.f32.gmra.mxu0 %v634
        %v772 = vpop.f32.mrf.mxu0
        %v773 = vadd.f32 %v717, %v772
        %774 = vmatmul.f32.gmra.mxu0 %v637
        %v775 = vpop.f32.mrf.mxu0
        %v776 = vadd.f32 %v717, %v775
        %777 = vmatmul.f32.gmra.mxu0 %v640
        %v778 = vpop.f32.mrf.mxu0
        %v779 = vadd.f32 %v717, %v778
        %780 = vmatmul.f32.gmra.mxu0 %v643
        %v781 = vpop.f32.mrf.mxu0
        %v782 = vadd.f32 %v717, %v781
        %783 = vmatmul.f32.gmra.mxu0 %v646
        %v784 = vpop.f32.mrf.mxu0
        %v785 = vadd.f32 %v717, %v784
        %786 = vmatmul.f32.gmra.mxu0 %v649
        %v787 = vpop.f32.mrf.mxu0
        %v788 = vadd.f32 %v717, %v787
        %789 = vdwg.mxu0
        %790 = vmatpush.msra.mxu0 %v712
        %791 = vmatpush.msra.mxu0 %v708
        %792 = vmatpush.msra.mxu0 %v704
        %793 = vmatpush.msra.mxu0 %v700
        %794 = vmatpush.msra.mxu0 %v696
        %795 = vmatpush.msra.mxu0 %v692
        %796 = vmatpush.msra.mxu0 %v688
        %797 = vmatpush.msra.mxu0 %v684
        %798 = vmatpush.msra.mxu0 %v680
        %799 = vmatpush.msra.mxu0 %v676
        %800 = vmatpush.msra.mxu0 %v672
        %801 = vmatpush.msra.mxu0 %v668
        %802 = vmatpush.msra.mxu0 %v664
        %803 = vmatpush.msra.mxu0 %v660
        %804 = vmatpush.msra.mxu0 %v656
        %805 = vmatpush.msra.mxu0 %v652
        %806 = vmatmul.f32.gmra.mxu0 %v604
        %v807 = vpop.f32.mrf.mxu0
        %v808 = vadd.f32 %v718, %v807
        %809 = vmatmul.f32.gmra.mxu0 %v607
        %v810 = vpop.f32.mrf.mxu0
        %v811 = vadd.f32 %v718, %v810
        %812 = vmatmul.f32.gmra.mxu0 %v610
        %v813 = vpop.f32.mrf.mxu0
        %v814 = vadd.f32 %v718, %v813
        %815 = vmatmul.f32.gmra.mxu0 %v613
        %v816 = vpop.f32.mrf.mxu0
        %v817 = vadd.f32 %v718, %v816
        %818 = vmatmul.f32.gmra.mxu0 %v616
        %v819 = vpop.f32.mrf.mxu0
        %v820 = vadd.f32 %v718, %v819
        %821 = vmatmul.f32.gmra.mxu0 %v619
        %v822 = vpop.f32.mrf.mxu0
        %v823 = vadd.f32 %v718, %v822
        %824 = vmatmul.f32.gmra.mxu0 %v622
        %v825 = vpop.f32.mrf.mxu0
        %v826 = vadd.f32 %v718, %v825
        %827 = vmatmul.f32.gmra.mxu0 %v625
        %v828 = vpop.f32.mrf.mxu0
        %v829 = vadd.f32 %v718, %v828
        %830 = vmatmul.f32.gmra.mxu0 %v628
        %v831 = vpop.f32.mrf.mxu0
        %v832 = vadd.f32 %v718, %v831
        %833 = vmatmul.f32.gmra.mxu0 %v631
        %v834 = vpop.f32.mrf.mxu0
        %v835 = vadd.f32 %v718, %v834
        %836 = vmatmul.f32.gmra.mxu0 %v634
        %v837 = vpop.f32.mrf.mxu0
        %v838 = vadd.f32 %v718, %v837
        %839 = vmatmul.f32.gmra.mxu0 %v637
        %v840 = vpop.f32.mrf.mxu0
        %v841 = vadd.f32 %v718, %v840
        %842 = vmatmul.f32.gmra.mxu0 %v640
        %v843 = vpop.f32.mrf.mxu0
        %v844 = vadd.f32 %v718, %v843
        %845 = vmatmul.f32.gmra.mxu0 %v643
        %v846 = vpop.f32.mrf.mxu0
        %v847 = vadd.f32 %v718, %v846
        %848 = vmatmul.f32.gmra.mxu0 %v646
        %v849 = vpop.f32.mrf.mxu0
        %v850 = vadd.f32 %v718, %v849
        %851 = vmatmul.f32.gmra.mxu0 %v649
        %v852 = vpop.f32.mrf.mxu0
        %v853 = vadd.f32 %v718, %v852
        %854 = vdwg.mxu0
        %855 = vmatpush.msra.mxu0 %v713
        %856 = vmatpush.msra.mxu0 %v709
        %857 = vmatpush.msra.mxu0 %v705
        %858 = vmatpush.msra.mxu0 %v701
        %859 = vmatpush.msra.mxu0 %v697
        %860 = vmatpush.msra.mxu0 %v693
        %861 = vmatpush.msra.mxu0 %v689
        %862 = vmatpush.msra.mxu0 %v685
        %863 = vmatpush.msra.mxu0 %v681
        %864 = vmatpush.msra.mxu0 %v677
        %865 = vmatpush.msra.mxu0 %v673
        %866 = vmatpush.msra.mxu0 %v669
        %867 = vmatpush.msra.mxu0 %v665
        %868 = vmatpush.msra.mxu0 %v661
        %869 = vmatpush.msra.mxu0 %v657
        %870 = vmatpush.msra.mxu0 %v653
        %871 = vmatmul.f32.gmra.mxu0 %v604
        %v872 = vpop.f32.mrf.mxu0
        %v873 = vadd.f32 %v719, %v872
        %874 = vmatmul.f32.gmra.mxu0 %v607
        %v875 = vpop.f32.mrf.mxu0
        %v876 = vadd.f32 %v719, %v875
        %877 = vmatmul.f32.gmra.mxu0 %v610
        %v878 = vpop.f32.mrf.mxu0
        %v879 = vadd.f32 %v719, %v878
        %880 = vmatmul.f32.gmra.mxu0 %v613
        %v881 = vpop.f32.mrf.mxu0
        %v882 = vadd.f32 %v719, %v881
        %883 = vmatmul.f32.gmra.mxu0 %v616
        %v884 = vpop.f32.mrf.mxu0
        %v885 = vadd.f32 %v719, %v884
        %886 = vmatmul.f32.gmra.mxu0 %v619
        %v887 = vpop.f32.mrf.mxu0
        %v888 = vadd.f32 %v719, %v887
        %889 = vmatmul.f32.gmra.mxu0 %v622
        %v890 = vpop.f32.mrf.mxu0
        %v891 = vadd.f32 %v719, %v890
        %892 = vmatmul.f32.gmra.mxu0 %v625
        %v893 = vpop.f32.mrf.mxu0
        %v894 = vadd.f32 %v719, %v893
        %895 = vmatmul.f32.gmra.mxu0 %v628
        %v896 = vpop.f32.mrf.mxu0
        %v897 = vadd.f32 %v719, %v896
        %898 = vmatmul.f32.gmra.mxu0 %v631
        %v899 = vpop.f32.mrf.mxu0
        %v900 = vadd.f32 %v719, %v899
        %901 = vmatmul.f32.gmra.mxu0 %v634
        %v902 = vpop.f32.mrf.mxu0
        %v903 = vadd.f32 %v719, %v902
        %904 = vmatmul.f32.gmra.mxu0 %v637
        %v905 = vpop.f32.mrf.mxu0
        %v906 = vadd.f32 %v719, %v905
        %907 = vmatmul.f32.gmra.mxu0 %v640
        %v908 = vpop.f32.mrf.mxu0
        %v909 = vadd.f32 %v719, %v908
        %910 = vmatmul.f32.gmra.mxu0 %v643
        %v911 = vpop.f32.mrf.mxu0
        %v912 = vadd.f32 %v719, %v911
        %913 = vmatmul.f32.gmra.mxu0 %v646
        %v914 = vpop.f32.mrf.mxu0
        %v915 = vadd.f32 %v719, %v914
        %916 = vmatmul.f32.gmra.mxu0 %v649
        %v917 = vpop.f32.mrf.mxu0
        %v918 = vadd.f32 %v719, %v917
        %919 = vdwg.mxu0
        %920 = vmatpush.msra.mxu0 %v714
        %921 = vmatpush.msra.mxu0 %v710
        %922 = vmatpush.msra.mxu0 %v706
        %923 = vmatpush.msra.mxu0 %v702
        %924 = vmatpush.msra.mxu0 %v698
        %925 = vmatpush.msra.mxu0 %v694
        %926 = vmatpush.msra.mxu0 %v690
        %927 = vmatpush.msra.mxu0 %v686
        %928 = vmatpush.msra.mxu0 %v682
        %929 = vmatpush.msra.mxu0 %v678
        %930 = vmatpush.msra.mxu0 %v674
        %931 = vmatpush.msra.mxu0 %v670
        %932 = vmatpush.msra.mxu0 %v666
        %933 = vmatpush.msra.mxu0 %v662
        %934 = vmatpush.msra.mxu0 %v658
        %935 = vmatpush.msra.mxu0 %v654
        %936 = vmatmul.f32.gmra.mxu0 %v604
        %v937 = vpop.f32.mrf.mxu0
        %v938 = vadd.f32 %v720, %v937
        %939 = vmatmul.f32.gmra.mxu0 %v607
        %v940 = vpop.f32.mrf.mxu0
        %v941 = vadd.f32 %v720, %v940
        %942 = vmatmul.f32.gmra.mxu0 %v610
        %v943 = vpop.f32.mrf.mxu0
        %v944 = vadd.f32 %v720, %v943
        %945 = vmatmul.f32.gmra.mxu0 %v613
        %v946 = vpop.f32.mrf.mxu0
        %v947 = vadd.f32 %v720, %v946
        %948 = vmatmul.f32.gmra.mxu0 %v616
        %v949 = vpop.f32.mrf.mxu0
        %v950 = vadd.f32 %v720, %v949
        %951 = vmatmul.f32.gmra.mxu0 %v619
        %v952 = vpop.f32.mrf.mxu0
        %v953 = vadd.f32 %v720, %v952
        %954 = vmatmul.f32.gmra.mxu0 %v622
        %v955 = vpop.f32.mrf.mxu0
        %v956 = vadd.f32 %v720, %v955
        %957 = vmatmul.f32.gmra.mxu0 %v625
        %v958 = vpop.f32.mrf.mxu0
        %v959 = vadd.f32 %v720, %v958
        %960 = vmatmul.f32.gmra.mxu0 %v628
        %v961 = vpop.f32.mrf.mxu0
        %v962 = vadd.f32 %v720, %v961
        %963 = vmatmul.f32.gmra.mxu0 %v631
        %v964 = vpop.f32.mrf.mxu0
        %v965 = vadd.f32 %v720, %v964
        %966 = vmatmul.f32.gmra.mxu0 %v634
        %v967 = vpop.f32.mrf.mxu0
        %v968 = vadd.f32 %v720, %v967
        %969 = vmatmul.f32.gmra.mxu0 %v637
        %v970 = vpop.f32.mrf.mxu0
        %v971 = vadd.f32 %v720, %v970
        %972 = vmatmul.f32.gmra.mxu0 %v640
        %v973 = vpop.f32.mrf.mxu0
        %v974 = vadd.f32 %v720, %v973
        %975 = vmatmul.f32.gmra.mxu0 %v643
        %v976 = vpop.f32.mrf.mxu0
        %v977 = vadd.f32 %v720, %v976
        %978 = vmatmul.f32.gmra.mxu0 %v646
        %v979 = vpop.f32.mrf.mxu0
        %v980 = vadd.f32 %v720, %v979
        %981 = vmatmul.f32.gmra.mxu0 %v649
        %v982 = vpop.f32.mrf.mxu0
        %v983 = vadd.f32 %v720, %v982
        %984 = vdwg.mxu0
        %v985 = vmax.f32 %v743, 0.0
        %v986 = vmax.f32 %v808, 0.0
        %v987 = vmax.f32 %v873, 0.0
        %v988 = vmax.f32 %v938, 0.0
        %v989 = vmax.f32 %v746, 0.0
        %v990 = vmax.f32 %v811, 0.0
        %v991 = vmax.f32 %v876, 0.0
        %v992 = vmax.f32 %v941, 0.0
        %v993 = vmax.f32 %v749, 0.0
        %v994 = vmax.f32 %v814, 0.0
        %v995 = vmax.f32 %v879, 0.0
        %v996 = vmax.f32 %v944, 0.0
        %v997 = vmax.f32 %v752, 0.0
        %v998 = vmax.f32 %v817, 0.0
        %v999 = vmax.f32 %v882, 0.0
        %v1000 = vmax.f32 %v947, 0.0
        %v1001 = vmax.f32 %v755, 0.0
        %v1002 = vmax.f32 %v820, 0.0
        %v1003 = vmax.f32 %v885, 0.0
        %v1004 = vmax.f32 %v950, 0.0
        %v1005 = vmax.f32 %v758, 0.0
        %v1006 = vmax.f32 %v823, 0.0
        %v1007 = vmax.f32 %v888, 0.0
        %v1008 = vmax.f32 %v953, 0.0
        %v1009 = vmax.f32 %v761, 0.0
        %v1010 = vmax.f32 %v826, 0.0
        %v1011 = vmax.f32 %v891, 0.0
        %v1012 = vmax.f32 %v956, 0.0
        %v1013 = vmax.f32 %v764, 0.0
        %v1014 = vmax.f32 %v829, 0.0
        %v1015 = vmax.f32 %v894, 0.0
        %v1016 = vmax.f32 %v959, 0.0
        %v1017 = vmax.f32 %v767, 0.0
        %v1018 = vmax.f32 %v832, 0.0
        %v1019 = vmax.f32 %v897, 0.0
        %v1020 = vmax.f32 %v962, 0.0
        %v1021 = vmax.f32 %v770, 0.0
        %v1022 = vmax.f32 %v835, 0.0
        %v1023 = vmax.f32 %v900, 0.0
        %v1024 = vmax.f32 %v965, 0.0
        %v1025 = vmax.f32 %v773, 0.0
        %v1026 = vmax.f32 %v838, 0.0
        %v1027 = vmax.f32 %v903, 0.0
        %v1028 = vmax.f32 %v968, 0.0
        %v1029 = vmax.f32 %v776, 0.0
        %v1030 = vmax.f32 %v841, 0.0
        %v1031 = vmax.f32 %v906, 0.0
        %v1032 = vmax.f32 %v971, 0.0
        %v1033 = vmax.f32 %v779, 0.0
        %v1034 = vmax.f32 %v844, 0.0
        %v1035 = vmax.f32 %v909, 0.0
        %v1036 = vmax.f32 %v974, 0.0
        %v1037 = vmax.f32 %v782, 0.0
        %v1038 = vmax.f32 %v847, 0.0
        %v1039 = vmax.f32 %v912, 0.0
        %v1040 = vmax.f32 %v977, 0.0
        %v1041 = vmax.f32 %v785, 0.0
        %v1042 = vmax.f32 %v850, 0.0
        %v1043 = vmax.f32 %v915, 0.0
        %v1044 = vmax.f32 %v980, 0.0
        %v1045 = vmax.f32 %v788, 0.0
        %v1046 = vmax.f32 %v853, 0.0
        %v1047 = vmax.f32 %v918, 0.0
        %v1048 = vmax.f32 %v983, 0.0
        %v1049 = vld [vmem:[#allocation6] sm:$0xff]
        %v1050 = vld [vmem:[#allocation6 + $0x8] sm:$0xff]
        %v1051 = vld [vmem:[#allocation6 + $0x10] sm:$0xff]
        %v1052 = vld [vmem:[#allocation6 + $0x18] sm:$0xff]
        %v1053 = vld [vmem:[#allocation6 + $0x20] sm:$0xff]
        %v1054 = vld [vmem:[#allocation6 + $0x28] sm:$0xff]
        %v1055 = vld [vmem:[#allocation6 + $0x30] sm:$0xff]
        %v1056 = vld [vmem:[#allocation6 + $0x38] sm:$0xff]
        %v1057 = vld [vmem:[#allocation6 + $0x40] sm:$0xff]
        %v1058 = vld [vmem:[#allocation6 + $0x48] sm:$0xff]
        %v1059 = vld [vmem:[#allocation6 + $0x50] sm:$0xff]
        %v1060 = vld [vmem:[#allocation6 + $0x58] sm:$0xff]
        %v1061 = vld [vmem:[#allocation6 + $0x60] sm:$0xff]
        %v1062 = vld [vmem:[#allocation6 + $0x68] sm:$0xff]
        %v1063 = vld [vmem:[#allocation6 + $0x70] sm:$0xff]
        %v1064 = vld [vmem:[#allocation6 + $0x78] sm:$0xff]
        %v1065 = vld [vmem:[#allocation6 + $0x80] sm:$0xff]
        %v1066 = vld [vmem:[#allocation6 + $0x88] sm:$0xff]
        %v1067 = vld [vmem:[#allocation6 + $0x90] sm:$0xff]
        %v1068 = vld [vmem:[#allocation6 + $0x98] sm:$0xff]
        %v1069 = vld [vmem:[#allocation6 + $0xa0] sm:$0xff]
        %v1070 = vld [vmem:[#allocation6 + $0xa8] sm:$0xff]
        %v1071 = vld [vmem:[#allocation6 + $0xb0] sm:$0xff]
        %v1072 = vld [vmem:[#allocation6 + $0xb8] sm:$0xff]
        %v1073 = vld [vmem:[#allocation6 + $0xc0] sm:$0xff]
        %v1074 = vld [vmem:[#allocation6 + $0xc8] sm:$0xff]
        %v1075 = vld [vmem:[#allocation6 + $0xd0] sm:$0xff]
        %v1076 = vld [vmem:[#allocation6 + $0xd8] sm:$0xff]
        %v1077 = vld [vmem:[#allocation6 + $0xe0] sm:$0xff]
        %v1078 = vld [vmem:[#allocation6 + $0xe8] sm:$0xff]
        %v1079 = vld [vmem:[#allocation6 + $0xf0] sm:$0xff]
        %v1080 = vld [vmem:[#allocation6 + $0xf8] sm:$0xff]
        %v1081 = vld [vmem:[#allocation6 + $0x100] sm:$0xff]
        %v1082 = vld [vmem:[#allocation6 + $0x108] sm:$0xff]
        %v1083 = vld [vmem:[#allocation6 + $0x110] sm:$0xff]
        %v1084 = vld [vmem:[#allocation6 + $0x118] sm:$0xff]
        %v1085 = vld [vmem:[#allocation6 + $0x120] sm:$0xff]
        %v1086 = vld [vmem:[#allocation6 + $0x128] sm:$0xff]
        %v1087 = vld [vmem:[#allocation6 + $0x130] sm:$0xff]
        %v1088 = vld [vmem:[#allocation6 + $0x138] sm:$0xff]
        %v1089 = vld [vmem:[#allocation6 + $0x140] sm:$0xff]
        %v1090 = vld [vmem:[#allocation6 + $0x148] sm:$0xff]
        %v1091 = vld [vmem:[#allocation6 + $0x150] sm:$0xff]
        %v1092 = vld [vmem:[#allocation6 + $0x158] sm:$0xff]
        %v1093 = vld [vmem:[#allocation6 + $0x160] sm:$0xff]
        %v1094 = vld [vmem:[#allocation6 + $0x168] sm:$0xff]
        %v1095 = vld [vmem:[#allocation6 + $0x170] sm:$0xff]
        %v1096 = vld [vmem:[#allocation6 + $0x178] sm:$0xff]
        %v1097 = vld [vmem:[#allocation6 + $0x180] sm:$0xff]
        %v1098 = vld [vmem:[#allocation6 + $0x188] sm:$0xff]
        %v1099 = vld [vmem:[#allocation6 + $0x190] sm:$0xff]
        %v1100 = vld [vmem:[#allocation6 + $0x198] sm:$0xff]
        %v1101 = vld [vmem:[#allocation6 + $0x1a0] sm:$0xff]
        %v1102 = vld [vmem:[#allocation6 + $0x1a8] sm:$0xff]
        %v1103 = vld [vmem:[#allocation6 + $0x1b0] sm:$0xff]
        %v1104 = vld [vmem:[#allocation6 + $0x1b8] sm:$0xff]
        %v1105 = vld [vmem:[#allocation6 + $0x1c0] sm:$0xff]
        %v1106 = vld [vmem:[#allocation6 + $0x1c8] sm:$0xff]
        %v1107 = vld [vmem:[#allocation6 + $0x1d0] sm:$0xff]
        %v1108 = vld [vmem:[#allocation6 + $0x1d8] sm:$0xff]
        %v1109 = vld [vmem:[#allocation6 + $0x1e0] sm:$0xff]
        %v1110 = vld [vmem:[#allocation6 + $0x1e8] sm:$0xff]
        %v1111 = vld [vmem:[#allocation6 + $0x1f0] sm:$0xff]
        %v1112 = vld [vmem:[#allocation6 + $0x1f8] sm:$0xff]
        %v1113 = vld [vmem:[%s6] sm:$0x1]
        %v1115 = vperm.slane %v1113, 0
        %1117 = vmatpush.msra.mxu0 %v1064
        %1118 = vmatpush.msra.mxu0 %v1063
        %1119 = vmatpush.msra.mxu0 %v1062
        %1120 = vmatpush.msra.mxu0 %v1061
        %1121 = vmatpush.msra.mxu0 %v1060
        %1122 = vmatpush.msra.mxu0 %v1059
        %1123 = vmatpush.msra.mxu0 %v1058
        %1124 = vmatpush.msra.mxu0 %v1057
        %1125 = vmatpush.msra.mxu0 %v1056
        %1126 = vmatpush.msra.mxu0 %v1055
        %1127 = vmatpush.msra.mxu0 %v1054
        %1128 = vmatpush.msra.mxu0 %v1053
        %1129 = vmatpush.msra.mxu0 %v1052
        %1130 = vmatpush.msra.mxu0 %v1051
        %1131 = vmatpush.msra.mxu0 %v1050
        %1132 = vmatpush.msra.mxu0 %v1049
        %1133 = vmatmul.f32.gmra.mxu0 %v985
        %v1134 = vpop.f32.mrf.mxu0
        %v1135 = vadd.f32 %v1115, %v1134
        %1136 = vmatmul.f32.gmra.mxu0 %v989
        %v1137 = vpop.f32.mrf.mxu0
        %v1138 = vadd.f32 %v1115, %v1137
        %1139 = vmatmul.f32.gmra.mxu0 %v993
        %v1140 = vpop.f32.mrf.mxu0
        %v1141 = vadd.f32 %v1115, %v1140
        %1142 = vmatmul.f32.gmra.mxu0 %v997
        %v1143 = vpop.f32.mrf.mxu0
        %v1144 = vadd.f32 %v1115, %v1143
        %1145 = vmatmul.f32.gmra.mxu0 %v1001
        %v1146 = vpop.f32.mrf.mxu0
        %v1147 = vadd.f32 %v1115, %v1146
        %1148 = vmatmul.f32.gmra.mxu0 %v1005
        %v1149 = vpop.f32.mrf.mxu0
        %v1150 = vadd.f32 %v1115, %v1149
        %1151 = vmatmul.f32.gmra.mxu0 %v1009
        %v1152 = vpop.f32.mrf.mxu0
        %v1153 = vadd.f32 %v1115, %v1152
        %1154 = vmatmul.f32.gmra.mxu0 %v1013
        %v1155 = vpop.f32.mrf.mxu0
        %v1156 = vadd.f32 %v1115, %v1155
        %1157 = vmatmul.f32.gmra.mxu0 %v1017
        %v1158 = vpop.f32.mrf.mxu0
        %v1159 = vadd.f32 %v1115, %v1158
        %1160 = vmatmul.f32.gmra.mxu0 %v1021
        %v1161 = vpop.f32.mrf.mxu0
        %v1162 = vadd.f32 %v1115, %v1161
        %1163 = vmatmul.f32.gmra.mxu0 %v1025
        %v1164 = vpop.f32.mrf.mxu0
        %v1165 = vadd.f32 %v1115, %v1164
        %1166 = vmatmul.f32.gmra.mxu0 %v1029
        %v1167 = vpop.f32.mrf.mxu0
        %v1168 = vadd.f32 %v1115, %v1167
        %1169 = vmatmul.f32.gmra.mxu0 %v1033
        %v1170 = vpop.f32.mrf.mxu0
        %v1171 = vadd.f32 %v1115, %v1170
        %1172 = vmatmul.f32.gmra.mxu0 %v1037
        %v1173 = vpop.f32.mrf.mxu0
        %v1174 = vadd.f32 %v1115, %v1173
        %1175 = vmatmul.f32.gmra.mxu0 %v1041
        %v1176 = vpop.f32.mrf.mxu0
        %v1177 = vadd.f32 %v1115, %v1176
        %1178 = vmatmul.f32.gmra.mxu0 %v1045
        %v1179 = vpop.f32.mrf.mxu0
        %v1180 = vadd.f32 %v1115, %v1179
        %1181 = vdwg.mxu0
        %1182 = vmatpush.msra.mxu0 %v1080
        %1183 = vmatpush.msra.mxu0 %v1079
        %1184 = vmatpush.msra.mxu0 %v1078
        %1185 = vmatpush.msra.mxu0 %v1077
        %1186 = vmatpush.msra.mxu0 %v1076
        %1187 = vmatpush.msra.mxu0 %v1075
        %1188 = vmatpush.msra.mxu0 %v1074
        %1189 = vmatpush.msra.mxu0 %v1073
        %1190 = vmatpush.msra.mxu0 %v1072
        %1191 = vmatpush.msra.mxu0 %v1071
        %1192 = vmatpush.msra.mxu0 %v1070
        %1193 = vmatpush.msra.mxu0 %v1069
        %1194 = vmatpush.msra.mxu0 %v1068
        %1195 = vmatpush.msra.mxu0 %v1067
        %1196 = vmatpush.msra.mxu0 %v1066
        %1197 = vmatpush.msra.mxu0 %v1065
        %1198 = vmatmul.f32.gmra.mxu0 %v986
        %v1199 = vpop.f32.mrf.mxu0
        %v1200 = vadd.f32 %v1135, %v1199
        %1201 = vmatmul.f32.gmra.mxu0 %v990
        %v1202 = vpop.f32.mrf.mxu0
        %v1203 = vadd.f32 %v1138, %v1202
        %1204 = vmatmul.f32.gmra.mxu0 %v994
        %v1205 = vpop.f32.mrf.mxu0
        %v1206 = vadd.f32 %v1141, %v1205
        %1207 = vmatmul.f32.gmra.mxu0 %v998
        %v1208 = vpop.f32.mrf.mxu0
        %v1209 = vadd.f32 %v1144, %v1208
        %1210 = vmatmul.f32.gmra.mxu0 %v1002
        %v1211 = vpop.f32.mrf.mxu0
        %v1212 = vadd.f32 %v1147, %v1211
        %1213 = vmatmul.f32.gmra.mxu0 %v1006
        %v1214 = vpop.f32.mrf.mxu0
        %v1215 = vadd.f32 %v1150, %v1214
        %1216 = vmatmul.f32.gmra.mxu0 %v1010
        %v1217 = vpop.f32.mrf.mxu0
        %v1218 = vadd.f32 %v1153, %v1217
        %1219 = vmatmul.f32.gmra.mxu0 %v1014
        %v1220 = vpop.f32.mrf.mxu0
        %v1221 = vadd.f32 %v1156, %v1220
        %1222 = vmatmul.f32.gmra.mxu0 %v1018
        %v1223 = vpop.f32.mrf.mxu0
        %v1224 = vadd.f32 %v1159, %v1223
        %1225 = vmatmul.f32.gmra.mxu0 %v1022
        %v1226 = vpop.f32.mrf.mxu0
        %v1227 = vadd.f32 %v1162, %v1226
        %1228 = vmatmul.f32.gmra.mxu0 %v1026
        %v1229 = vpop.f32.mrf.mxu0
        %v1230 = vadd.f32 %v1165, %v1229
        %1231 = vmatmul.f32.gmra.mxu0 %v1030
        %v1232 = vpop.f32.mrf.mxu0
        %v1233 = vadd.f32 %v1168, %v1232
        %1234 = vmatmul.f32.gmra.mxu0 %v1034
        %v1235 = vpop.f32.mrf.mxu0
        %v1236 = vadd.f32 %v1171, %v1235
        %1237 = vmatmul.f32.gmra.mxu0 %v1038
        %v1238 = vpop.f32.mrf.mxu0
        %v1239 = vadd.f32 %v1174, %v1238
        %1240 = vmatmul.f32.gmra.mxu0 %v1042
        %v1241 = vpop.f32.mrf.mxu0
        %v1242 = vadd.f32 %v1177, %v1241
        %1243 = vmatmul.f32.gmra.mxu0 %v1046
        %v1244 = vpop.f32.mrf.mxu0
        %v1245 = vadd.f32 %v1180, %v1244
        %1246 = vdwg.mxu0
        %1247 = vmatpush.msra.mxu0 %v1096
        %1248 = vmatpush.msra.mxu0 %v1095
        %1249 = vmatpush.msra.mxu0 %v1094
        %1250 = vmatpush.msra.mxu0 %v1093
        %1251 = vmatpush.msra.mxu0 %v1092
        %1252 = vmatpush.msra.mxu0 %v1091
        %1253 = vmatpush.msra.mxu0 %v1090
        %1254 = vmatpush.msra.mxu0 %v1089
        %1255 = vmatpush.msra.mxu0 %v1088
        %1256 = vmatpush.msra.mxu0 %v1087
        %1257 = vmatpush.msra.mxu0 %v1086
        %1258 = vmatpush.msra.mxu0 %v1085
        %1259 = vmatpush.msra.mxu0 %v1084
        %1260 = vmatpush.msra.mxu0 %v1083
        %1261 = vmatpush.msra.mxu0 %v1082
        %1262 = vmatpush.msra.mxu0 %v1081
        %1263 = vmatmul.f32.gmra.mxu0 %v987
        %v1264 = vpop.f32.mrf.mxu0
        %v1265 = vadd.f32 %v1200, %v1264
        %1266 = vmatmul.f32.gmra.mxu0 %v991
        %v1267 = vpop.f32.mrf.mxu0
        %v1268 = vadd.f32 %v1203, %v1267
        %1269 = vmatmul.f32.gmra.mxu0 %v995
        %v1270 = vpop.f32.mrf.mxu0
        %v1271 = vadd.f32 %v1206, %v1270
        %1272 = vmatmul.f32.gmra.mxu0 %v999
        %v1273 = vpop.f32.mrf.mxu0
        %v1274 = vadd.f32 %v1209, %v1273
        %1275 = vmatmul.f32.gmra.mxu0 %v1003
        %v1276 = vpop.f32.mrf.mxu0
        %v1277 = vadd.f32 %v1212, %v1276
        %1278 = vmatmul.f32.gmra.mxu0 %v1007
        %v1279 = vpop.f32.mrf.mxu0
        %v1280 = vadd.f32 %v1215, %v1279
        %1281 = vmatmul.f32.gmra.mxu0 %v1011
        %v1282 = vpop.f32.mrf.mxu0
        %v1283 = vadd.f32 %v1218, %v1282
        %1284 = vmatmul.f32.gmra.mxu0 %v1015
        %v1285 = vpop.f32.mrf.mxu0
        %v1286 = vadd.f32 %v1221, %v1285
        %1287 = vmatmul.f32.gmra.mxu0 %v1019
        %v1288 = vpop.f32.mrf.mxu0
        %v1289 = vadd.f32 %v1224, %v1288
        %1290 = vmatmul.f32.gmra.mxu0 %v1023
        %v1291 = vpop.f32.mrf.mxu0
        %v1292 = vadd.f32 %v1227, %v1291
        %1293 = vmatmul.f32.gmra.mxu0 %v1027
        %v1294 = vpop.f32.mrf.mxu0
        %v1295 = vadd.f32 %v1230, %v1294
        %1296 = vmatmul.f32.gmra.mxu0 %v1031
        %v1297 = vpop.f32.mrf.mxu0
        %v1298 = vadd.f32 %v1233, %v1297
        %1299 = vmatmul.f32.gmra.mxu0 %v1035
        %v1300 = vpop.f32.mrf.mxu0
        %v1301 = vadd.f32 %v1236, %v1300
        %1302 = vmatmul.f32.gmra.mxu0 %v1039
        %v1303 = vpop.f32.mrf.mxu0
        %v1304 = vadd.f32 %v1239, %v1303
        %1305 = vmatmul.f32.gmra.mxu0 %v1043
        %v1306 = vpop.f32.mrf.mxu0
        %v1307 = vadd.f32 %v1242, %v1306
        %1308 = vmatmul.f32.gmra.mxu0 %v1047
        %v1309 = vpop.f32.mrf.mxu0
        %v1310 = vadd.f32 %v1245, %v1309
        %1311 = vdwg.mxu0
        %1312 = vmatpush.msra.mxu0 %v1112
        %1313 = vmatpush.msra.mxu0 %v1111
        %1314 = vmatpush.msra.mxu0 %v1110
        %1315 = vmatpush.msra.mxu0 %v1109
        %1316 = vmatpush.msra.mxu0 %v1108
        %1317 = vmatpush.msra.mxu0 %v1107
        %1318 = vmatpush.msra.mxu0 %v1106
        %1319 = vmatpush.msra.mxu0 %v1105
        %1320 = vmatpush.msra.mxu0 %v1104
        %1321 = vmatpush.msra.mxu0 %v1103
        %1322 = vmatpush.msra.mxu0 %v1102
        %1323 = vmatpush.msra.mxu0 %v1101
        %1324 = vmatpush.msra.mxu0 %v1100
        %1325 = vmatpush.msra.mxu0 %v1099
        %1326 = vmatpush.msra.mxu0 %v1098
        %1327 = vmatpush.msra.mxu0 %v1097
        %1328 = vmatmul.f32.gmra.mxu0 %v988
        %v1329 = vpop.f32.mrf.mxu0
        %v1330 = vadd.f32 %v1265, %v1329
        %1331 = vmatmul.f32.gmra.mxu0 %v992
        %v1332 = vpop.f32.mrf.mxu0
        %v1333 = vadd.f32 %v1268, %v1332
        %1334 = vmatmul.f32.gmra.mxu0 %v996
        %v1335 = vpop.f32.mrf.mxu0
        %v1336 = vadd.f32 %v1271, %v1335
        %1337 = vmatmul.f32.gmra.mxu0 %v1000
        %v1338 = vpop.f32.mrf.mxu0
        %v1339 = vadd.f32 %v1274, %v1338
        %1340 = vmatmul.f32.gmra.mxu0 %v1004
        %v1341 = vpop.f32.mrf.mxu0
        %v1342 = vadd.f32 %v1277, %v1341
        %1343 = vmatmul.f32.gmra.mxu0 %v1008
        %v1344 = vpop.f32.mrf.mxu0
        %v1345 = vadd.f32 %v1280, %v1344
        %1346 = vmatmul.f32.gmra.mxu0 %v1012
        %v1347 = vpop.f32.mrf.mxu0
        %v1348 = vadd.f32 %v1283, %v1347
        %1349 = vmatmul.f32.gmra.mxu0 %v1016
        %v1350 = vpop.f32.mrf.mxu0
        %v1351 = vadd.f32 %v1286, %v1350
        %1352 = vmatmul.f32.gmra.mxu0 %v1020
        %v1353 = vpop.f32.mrf.mxu0
        %v1354 = vadd.f32 %v1289, %v1353
        %1355 = vmatmul.f32.gmra.mxu0 %v1024
        %v1356 = vpop.f32.mrf.mxu0
        %v1357 = vadd.f32 %v1292, %v1356
        %1358 = vmatmul.f32.gmra.mxu0 %v1028
        %v1359 = vpop.f32.mrf.mxu0
        %v1360 = vadd.f32 %v1295, %v1359
        %1361 = vmatmul.f32.gmra.mxu0 %v1032
        %v1362 = vpop.f32.mrf.mxu0
        %v1363 = vadd.f32 %v1298, %v1362
        %1364 = vmatmul.f32.gmra.mxu0 %v1036
        %v1365 = vpop.f32.mrf.mxu0
        %v1366 = vadd.f32 %v1301, %v1365
        %1367 = vmatmul.f32.gmra.mxu0 %v1040
        %v1368 = vpop.f32.mrf.mxu0
        %v1369 = vadd.f32 %v1304, %v1368
        %1370 = vmatmul.f32.gmra.mxu0 %v1044
        %v1371 = vpop.f32.mrf.mxu0
        %v1372 = vadd.f32 %v1307, %v1371
        %1373 = vmatmul.f32.gmra.mxu0 %v1048
        %v1374 = vpop.f32.mrf.mxu0
        %v1375 = vadd.f32 %v1310, %v1374
        %1376 = vdwg.mxu0
        %v1377 = vmax.f32 %v1330, 0.0
        %v1378 = vmax.f32 %v1333, 0.0
        %v1379 = vmax.f32 %v1336, 0.0
        %v1380 = vmax.f32 %v1339, 0.0
        %v1381 = vmax.f32 %v1342, 0.0
        %v1382 = vmax.f32 %v1345, 0.0
        %v1383 = vmax.f32 %v1348, 0.0
        %v1384 = vmax.f32 %v1351, 0.0
        %v1385 = vmax.f32 %v1354, 0.0
        %v1386 = vmax.f32 %v1357, 0.0
        %v1387 = vmax.f32 %v1360, 0.0
        %v1388 = vmax.f32 %v1363, 0.0
        %v1389 = vmax.f32 %v1366, 0.0
        %v1390 = vmax.f32 %v1369, 0.0
        %v1391 = vmax.f32 %v1372, 0.0
        %v1392 = vmax.f32 %v1375, 0.0
        %v1393 = vld [vmem:[#allocation8] sm:$0xff]
        %v1394 = vld [vmem:[#allocation8 + $0x8] sm:$0xff]
        %v1395 = vld [vmem:[#allocation8 + $0x10] sm:$0xff]
        %v1396 = vld [vmem:[#allocation8 + $0x18] sm:$0xff]
        %v1397 = vld [vmem:[#allocation8 + $0x20] sm:$0xff]
        %v1398 = vld [vmem:[#allocation8 + $0x28] sm:$0xff]
        %v1399 = vld [vmem:[#allocation8 + $0x30] sm:$0xff]
        %v1400 = vld [vmem:[#allocation8 + $0x38] sm:$0xff]
        %v1401 = vld [vmem:[#allocation8 + $0x40] sm:$0xff]
        %v1402 = vld [vmem:[#allocation8 + $0x48] sm:$0xff]
        %v1403 = vld [vmem:[#allocation8 + $0x50] sm:$0xff]
        %v1404 = vld [vmem:[#allocation8 + $0x58] sm:$0xff]
        %v1405 = vld [vmem:[#allocation8 + $0x60] sm:$0xff]
        %v1406 = vld [vmem:[#allocation8 + $0x68] sm:$0xff]
        %v1407 = vld [vmem:[#allocation8 + $0x70] sm:$0xff]
        %v1408 = vld [vmem:[#allocation8 + $0x78] sm:$0xff]
        %v1409 = vld [vmem:[#allocation8 + $0x80] sm:$0xff]
        %v1410 = vld [vmem:[#allocation8 + $0x88] sm:$0xff]
        %v1411 = vld [vmem:[#allocation8 + $0x90] sm:$0xff]
        %v1412 = vld [vmem:[#allocation8 + $0x98] sm:$0xff]
        %v1413 = vld [vmem:[#allocation8 + $0xa0] sm:$0xff]
        %v1414 = vld [vmem:[#allocation8 + $0xa8] sm:$0xff]
        %v1415 = vld [vmem:[#allocation8 + $0xb0] sm:$0xff]
        %v1416 = vld [vmem:[#allocation8 + $0xb8] sm:$0xff]
        %v1417 = vld [vmem:[#allocation8 + $0xc0] sm:$0xff]
        %v1418 = vld [vmem:[#allocation8 + $0xc8] sm:$0xff]
        %v1419 = vld [vmem:[#allocation8 + $0xd0] sm:$0xff]
        %v1420 = vld [vmem:[#allocation8 + $0xd8] sm:$0xff]
        %v1421 = vld [vmem:[#allocation8 + $0xe0] sm:$0xff]
        %v1422 = vld [vmem:[#allocation8 + $0xe8] sm:$0xff]
        %v1423 = vld [vmem:[#allocation8 + $0xf0] sm:$0xff]
        %v1424 = vld [vmem:[#allocation8 + $0xf8] sm:$0xff]
        %v1425 = vld [vmem:[#allocation8 + $0x100] sm:$0xff]
        %v1426 = vld [vmem:[#allocation8 + $0x108] sm:$0xff]
        %v1427 = vld [vmem:[#allocation8 + $0x110] sm:$0xff]
        %v1428 = vld [vmem:[#allocation8 + $0x118] sm:$0xff]
        %v1429 = vld [vmem:[#allocation8 + $0x120] sm:$0xff]
        %v1430 = vld [vmem:[#allocation8 + $0x128] sm:$0xff]
        %v1431 = vld [vmem:[#allocation8 + $0x130] sm:$0xff]
        %v1432 = vld [vmem:[#allocation8 + $0x138] sm:$0xff]
        %v1433 = vld [vmem:[#allocation8 + $0x140] sm:$0xff]
        %v1434 = vld [vmem:[#allocation8 + $0x148] sm:$0xff]
        %v1435 = vld [vmem:[#allocation8 + $0x150] sm:$0xff]
        %v1436 = vld [vmem:[#allocation8 + $0x158] sm:$0xff]
        %v1437 = vld [vmem:[#allocation8 + $0x160] sm:$0xff]
        %v1438 = vld [vmem:[#allocation8 + $0x168] sm:$0xff]
        %v1439 = vld [vmem:[#allocation8 + $0x170] sm:$0xff]
        %v1440 = vld [vmem:[#allocation8 + $0x178] sm:$0xff]
        %v1441 = vld [vmem:[#allocation8 + $0x180] sm:$0xff]
        %v1442 = vld [vmem:[#allocation8 + $0x188] sm:$0xff]
        %v1443 = vld [vmem:[#allocation8 + $0x190] sm:$0xff]
        %v1444 = vld [vmem:[#allocation8 + $0x198] sm:$0xff]
        %v1445 = vld [vmem:[#allocation8 + $0x1a0] sm:$0xff]
        %v1446 = vld [vmem:[#allocation8 + $0x1a8] sm:$0xff]
        %v1447 = vld [vmem:[#allocation8 + $0x1b0] sm:$0xff]
        %v1448 = vld [vmem:[#allocation8 + $0x1b8] sm:$0xff]
        %v1449 = vld [vmem:[#allocation8 + $0x1c0] sm:$0xff]
        %v1450 = vld [vmem:[#allocation8 + $0x1c8] sm:$0xff]
        %v1451 = vld [vmem:[#allocation8 + $0x1d0] sm:$0xff]
        %v1452 = vld [vmem:[#allocation8 + $0x1d8] sm:$0xff]
        %v1453 = vld [vmem:[#allocation8 + $0x1e0] sm:$0xff]
        %v1454 = vld [vmem:[#allocation8 + $0x1e8] sm:$0xff]
        %v1455 = vld [vmem:[#allocation8 + $0x1f0] sm:$0xff]
        %v1456 = vld [vmem:[#allocation8 + $0x1f8] sm:$0xff]
        %v1457 = vld [vmem:[%s8] sm:$0xf]
        %v1459 = vperm.slane %v1457, 0
        %v1460 = vperm.slane %v1457, 1
        %v1461 = vperm.slane %v1457, 2
        %v1462 = vperm.slane %v1457, 3
        %1467 = vmatpush.msra.mxu0 %v1453
        %1468 = vmatpush.msra.mxu0 %v1449
        %1469 = vmatpush.msra.mxu0 %v1445
        %1470 = vmatpush.msra.mxu0 %v1441
        %1471 = vmatpush.msra.mxu0 %v1437
        %1472 = vmatpush.msra.mxu0 %v1433
        %1473 = vmatpush.msra.mxu0 %v1429
        %1474 = vmatpush.msra.mxu0 %v1425
        %1475 = vmatpush.msra.mxu0 %v1421
        %1476 = vmatpush.msra.mxu0 %v1417
        %1477 = vmatpush.msra.mxu0 %v1413
        %1478 = vmatpush.msra.mxu0 %v1409
        %1479 = vmatpush.msra.mxu0 %v1405
        %1480 = vmatpush.msra.mxu0 %v1401
        %1481 = vmatpush.msra.mxu0 %v1397
        %1482 = vmatpush.msra.mxu0 %v1393
        %1483 = vmatmul.f32.gmra.mxu0 %v1377
        %v1484 = vpop.f32.mrf.mxu0
        %v1485 = vadd.f32 %v1459, %v1484
        %1486 = vmatmul.f32.gmra.mxu0 %v1378
        %v1487 = vpop.f32.mrf.mxu0
        %v1488 = vadd.f32 %v1459, %v1487
        %1489 = vmatmul.f32.gmra.mxu0 %v1379
        %v1490 = vpop.f32.mrf.mxu0
        %v1491 = vadd.f32 %v1459, %v1490
        %1492 = vmatmul.f32.gmra.mxu0 %v1380
        %v1493 = vpop.f32.mrf.mxu0
        %v1494 = vadd.f32 %v1459, %v1493
        %1495 = vmatmul.f32.gmra.mxu0 %v1381
        %v1496 = vpop.f32.mrf.mxu0
        %v1497 = vadd.f32 %v1459, %v1496
        %1498 = vmatmul.f32.gmra.mxu0 %v1382
        %v1499 = vpop.f32.mrf.mxu0
        %v1500 = vadd.f32 %v1459, %v1499
        %1501 = vmatmul.f32.gmra.mxu0 %v1383
        %v1502 = vpop.f32.mrf.mxu0
        %v1503 = vadd.f32 %v1459, %v1502
        %1504 = vmatmul.f32.gmra.mxu0 %v1384
        %v1505 = vpop.f32.mrf.mxu0
        %v1506 = vadd.f32 %v1459, %v1505
        %1507 = vmatmul.f32.gmra.mxu0 %v1385
        %v1508 = vpop.f32.mrf.mxu0
        %v1509 = vadd.f32 %v1459, %v1508
        %1510 = vmatmul.f32.gmra.mxu0 %v1386
        %v1511 = vpop.f32.mrf.mxu0
        %v1512 = vadd.f32 %v1459, %v1511
        %1513 = vmatmul.f32.gmra.mxu0 %v1387
        %v1514 = vpop.f32.mrf.mxu0
        %v1515 = vadd.f32 %v1459, %v1514
        %1516 = vmatmul.f32.gmra.mxu0 %v1388
        %v1517 = vpop.f32.mrf.mxu0
        %v1518 = vadd.f32 %v1459, %v1517
        %1519 = vmatmul.f32.gmra.mxu0 %v1389
        %v1520 = vpop.f32.mrf.mxu0
        %v1521 = vadd.f32 %v1459, %v1520
        %1522 = vmatmul.f32.gmra.mxu0 %v1390
        %v1523 = vpop.f32.mrf.mxu0
        %v1524 = vadd.f32 %v1459, %v1523
        %1525 = vmatmul.f32.gmra.mxu0 %v1391
        %v1526 = vpop.f32.mrf.mxu0
        %v1527 = vadd.f32 %v1459, %v1526
        %1528 = vmatmul.f32.gmra.mxu0 %v1392
        %v1529 = vpop.f32.mrf.mxu0
        %v1530 = vadd.f32 %v1459, %v1529
        %1531 = vdwg.mxu0
        %1532 = vmatpush.msra.mxu0 %v1454
        %1533 = vmatpush.msra.mxu0 %v1450
        %1534 = vmatpush.msra.mxu0 %v1446
        %1535 = vmatpush.msra.mxu0 %v1442
        %1536 = vmatpush.msra.mxu0 %v1438
        %1537 = vmatpush.msra.mxu0 %v1434
        %1538 = vmatpush.msra.mxu0 %v1430
        %1539 = vmatpush.msra.mxu0 %v1426
        %1540 = vmatpush.msra.mxu0 %v1422
        %1541 = vmatpush.msra.mxu0 %v1418
        %1542 = vmatpush.msra.mxu0 %v1414
        %1543 = vmatpush.msra.mxu0 %v1410
        %1544 = vmatpush.msra.mxu0 %v1406
        %1545 = vmatpush.msra.mxu0 %v1402
        %1546 = vmatpush.msra.mxu0 %v1398
        %1547 = vmatpush.msra.mxu0 %v1394
        %1548 = vmatmul.f32.gmra.mxu0 %v1377
        %v1549 = vpop.f32.mrf.mxu0
        %v1550 = vadd.f32 %v1460, %v1549
        %1551 = vmatmul.f32.gmra.mxu0 %v1378
        %v1552 = vpop.f32.mrf.mxu0
        %v1553 = vadd.f32 %v1460, %v1552
        %1554 = vmatmul.f32.gmra.mxu0 %v1379
        %v1555 = vpop.f32.mrf.mxu0
        %v1556 = vadd.f32 %v1460, %v1555
        %1557 = vmatmul.f32.gmra.mxu0 %v1380
        %v1558 = vpop.f32.mrf.mxu0
        %v1559 = vadd.f32 %v1460, %v1558
        %1560 = vmatmul.f32.gmra.mxu0 %v1381
        %v1561 = vpop.f32.mrf.mxu0
        %v1562 = vadd.f32 %v1460, %v1561
        %1563 = vmatmul.f32.gmra.mxu0 %v1382
        %v1564 = vpop.f32.mrf.mxu0
        %v1565 = vadd.f32 %v1460, %v1564
        %1566 = vmatmul.f32.gmra.mxu0 %v1383
        %v1567 = vpop.f32.mrf.mxu0
        %v1568 = vadd.f32 %v1460, %v1567
        %1569 = vmatmul.f32.gmra.mxu0 %v1384
        %v1570 = vpop.f32.mrf.mxu0
        %v1571 = vadd.f32 %v1460, %v1570
        %1572 = vmatmul.f32.gmra.mxu0 %v1385
        %v1573 = vpop.f32.mrf.mxu0
        %v1574 = vadd.f32 %v1460, %v1573
        %1575 = vmatmul.f32.gmra.mxu0 %v1386
        %v1576 = vpop.f32.mrf.mxu0
        %v1577 = vadd.f32 %v1460, %v1576
        %1578 = vmatmul.f32.gmra.mxu0 %v1387
        %v1579 = vpop.f32.mrf.mxu0
        %v1580 = vadd.f32 %v1460, %v1579
        %1581 = vmatmul.f32.gmra.mxu0 %v1388
        %v1582 = vpop.f32.mrf.mxu0
        %v1583 = vadd.f32 %v1460, %v1582
        %1584 = vmatmul.f32.gmra.mxu0 %v1389
        %v1585 = vpop.f32.mrf.mxu0
        %v1586 = vadd.f32 %v1460, %v1585
        %1587 = vmatmul.f32.gmra.mxu0 %v1390
        %v1588 = vpop.f32.mrf.mxu0
        %v1589 = vadd.f32 %v1460, %v1588
        %1590 = vmatmul.f32.gmra.mxu0 %v1391
        %v1591 = vpop.f32.mrf.mxu0
        %v1592 = vadd.f32 %v1460, %v1591
        %1593 = vmatmul.f32.gmra.mxu0 %v1392
        %v1594 = vpop.f32.mrf.mxu0
        %v1595 = vadd.f32 %v1460, %v1594
        %1596 = vdwg.mxu0
        %1597 = vmatpush.msra.mxu0 %v1455
        %1598 = vmatpush.msra.mxu0 %v1451
        %1599 = vmatpush.msra.mxu0 %v1447
        %1600 = vmatpush.msra.mxu0 %v1443
        %1601 = vmatpush.msra.mxu0 %v1439
        %1602 = vmatpush.msra.mxu0 %v1435
        %1603 = vmatpush.msra.mxu0 %v1431
        %1604 = vmatpush.msra.mxu0 %v1427
        %1605 = vmatpush.msra.mxu0 %v1423
        %1606 = vmatpush.msra.mxu0 %v1419
        %1607 = vmatpush.msra.mxu0 %v1415
        %1608 = vmatpush.msra.mxu0 %v1411
        %1609 = vmatpush.msra.mxu0 %v1407
        %1610 = vmatpush.msra.mxu0 %v1403
        %1611 = vmatpush.msra.mxu0 %v1399
        %1612 = vmatpush.msra.mxu0 %v1395
        %1613 = vmatmul.f32.gmra.mxu0 %v1377
        %v1614 = vpop.f32.mrf.mxu0
        %v1615 = vadd.f32 %v1461, %v1614
        %1616 = vmatmul.f32.gmra.mxu0 %v1378
        %v1617 = vpop.f32.mrf.mxu0
        %v1618 = vadd.f32 %v1461, %v1617
        %1619 = vmatmul.f32.gmra.mxu0 %v1379
        %v1620 = vpop.f32.mrf.mxu0
        %v1621 = vadd.f32 %v1461, %v1620
        %1622 = vmatmul.f32.gmra.mxu0 %v1380
        %v1623 = vpop.f32.mrf.mxu0
        %v1624 = vadd.f32 %v1461, %v1623
        %1625 = vmatmul.f32.gmra.mxu0 %v1381
        %v1626 = vpop.f32.mrf.mxu0
        %v1627 = vadd.f32 %v1461, %v1626
        %1628 = vmatmul.f32.gmra.mxu0 %v1382
        %v1629 = vpop.f32.mrf.mxu0
        %v1630 = vadd.f32 %v1461, %v1629
        %1631 = vmatmul.f32.gmra.mxu0 %v1383
        %v1632 = vpop.f32.mrf.mxu0
        %v1633 = vadd.f32 %v1461, %v1632
        %1634 = vmatmul.f32.gmra.mxu0 %v1384
        %v1635 = vpop.f32.mrf.mxu0
        %v1636 = vadd.f32 %v1461, %v1635
        %1637 = vmatmul.f32.gmra.mxu0 %v1385
        %v1638 = vpop.f32.mrf.mxu0
        %v1639 = vadd.f32 %v1461, %v1638
        %1640 = vmatmul.f32.gmra.mxu0 %v1386
        %v1641 = vpop.f32.mrf.mxu0
        %v1642 = vadd.f32 %v1461, %v1641
        %1643 = vmatmul.f32.gmra.mxu0 %v1387
        %v1644 = vpop.f32.mrf.mxu0
        %v1645 = vadd.f32 %v1461, %v1644
        %1646 = vmatmul.f32.gmra.mxu0 %v1388
        %v1647 = vpop.f32.mrf.mxu0
        %v1648 = vadd.f32 %v1461, %v1647
        %1649 = vmatmul.f32.gmra.mxu0 %v1389
        %v1650 = vpop.f32.mrf.mxu0
        %v1651 = vadd.f32 %v1461, %v1650
        %1652 = vmatmul.f32.gmra.mxu0 %v1390
        %v1653 = vpop.f32.mrf.mxu0
        %v1654 = vadd.f32 %v1461, %v1653
        %1655 = vmatmul.f32.gmra.mxu0 %v1391
        %v1656 = vpop.f32.mrf.mxu0
        %v1657 = vadd.f32 %v1461, %v1656
        %1658 = vmatmul.f32.gmra.mxu0 %v1392
        %v1659 = vpop.f32.mrf.mxu0
        %v1660 = vadd.f32 %v1461, %v1659
        %1661 = vdwg.mxu0
        %1662 = vmatpush.msra.mxu0 %v1456
        %1663 = vmatpush.msra.mxu0 %v1452
        %1664 = vmatpush.msra.mxu0 %v1448
        %1665 = vmatpush.msra.mxu0 %v1444
        %1666 = vmatpush.msra.mxu0 %v1440
        %1667 = vmatpush.msra.mxu0 %v1436
        %1668 = vmatpush.msra.mxu0 %v1432
        %1669 = vmatpush.msra.mxu0 %v1428
        %1670 = vmatpush.msra.mxu0 %v1424
        %1671 = vmatpush.msra.mxu0 %v1420
        %1672 = vmatpush.msra.mxu0 %v1416
        %1673 = vmatpush.msra.mxu0 %v1412
        %1674 = vmatpush.msra.mxu0 %v1408
        %1675 = vmatpush.msra.mxu0 %v1404
        %1676 = vmatpush.msra.mxu0 %v1400
        %1677 = vmatpush.msra.mxu0 %v1396
        %1678 = vmatmul.f32.gmra.mxu0 %v1377
        %v1679 = vpop.f32.mrf.mxu0
        %v1680 = vadd.f32 %v1462, %v1679
        %1681 = vmatmul.f32.gmra.mxu0 %v1378
        %v1682 = vpop.f32.mrf.mxu0
        %v1683 = vadd.f32 %v1462, %v1682
        %1684 = vmatmul.f32.gmra.mxu0 %v1379
        %v1685 = vpop.f32.mrf.mxu0
        %v1686 = vadd.f32 %v1462, %v1685
        %1687 = vmatmul.f32.gmra.mxu0 %v1380
        %v1688 = vpop.f32.mrf.mxu0
        %v1689 = vadd.f32 %v1462, %v1688
        %1690 = vmatmul.f32.gmra.mxu0 %v1381
        %v1691 = vpop.f32.mrf.mxu0
        %v1692 = vadd.f32 %v1462, %v1691
        %1693 = vmatmul.f32.gmra.mxu0 %v1382
        %v1694 = vpop.f32.mrf.mxu0
        %v1695 = vadd.f32 %v1462, %v1694
        %1696 = vmatmul.f32.gmra.mxu0 %v1383
        %v1697 = vpop.f32.mrf.mxu0
        %v1698 = vadd.f32 %v1462, %v1697
        %1699 = vmatmul.f32.gmra.mxu0 %v1384
        %v1700 = vpop.f32.mrf.mxu0
        %v1701 = vadd.f32 %v1462, %v1700
        %1702 = vmatmul.f32.gmra.mxu0 %v1385
        %v1703 = vpop.f32.mrf.mxu0
        %v1704 = vadd.f32 %v1462, %v1703
        %1705 = vmatmul.f32.gmra.mxu0 %v1386
        %v1706 = vpop.f32.mrf.mxu0
        %v1707 = vadd.f32 %v1462, %v1706
        %1708 = vmatmul.f32.gmra.mxu0 %v1387
        %v1709 = vpop.f32.mrf.mxu0
        %v1710 = vadd.f32 %v1462, %v1709
        %1711 = vmatmul.f32.gmra.mxu0 %v1388
        %v1712 = vpop.f32.mrf.mxu0
        %v1713 = vadd.f32 %v1462, %v1712
        %1714 = vmatmul.f32.gmra.mxu0 %v1389
        %v1715 = vpop.f32.mrf.mxu0
        %v1716 = vadd.f32 %v1462, %v1715
        %1717 = vmatmul.f32.gmra.mxu0 %v1390
        %v1718 = vpop.f32.mrf.mxu0
        %v1719 = vadd.f32 %v1462, %v1718
        %1720 = vmatmul.f32.gmra.mxu0 %v1391
        %v1721 = vpop.f32.mrf.mxu0
        %v1722 = vadd.f32 %v1462, %v1721
        %1723 = vmatmul.f32.gmra.mxu0 %v1392
        %v1724 = vpop.f32.mrf.mxu0
        %v1725 = vadd.f32 %v1462, %v1724
        %1726 = vdwg.mxu0
        %v1727 = vmax.f32 %v1485, 0.0
        %v1728 = vmax.f32 %v1550, 0.0
        %v1729 = vmax.f32 %v1615, 0.0
        %v1730 = vmax.f32 %v1680, 0.0
        %v1731 = vmax.f32 %v1488, 0.0
        %v1732 = vmax.f32 %v1553, 0.0
        %v1733 = vmax.f32 %v1618, 0.0
        %v1734 = vmax.f32 %v1683, 0.0
        %v1735 = vmax.f32 %v1491, 0.0
        %v1736 = vmax.f32 %v1556, 0.0
        %v1737 = vmax.f32 %v1621, 0.0
        %v1738 = vmax.f32 %v1686, 0.0
        %v1739 = vmax.f32 %v1494, 0.0
        %v1740 = vmax.f32 %v1559, 0.0
        %v1741 = vmax.f32 %v1624, 0.0
        %v1742 = vmax.f32 %v1689, 0.0
        %v1743 = vmax.f32 %v1497, 0.0
        %v1744 = vmax.f32 %v1562, 0.0
        %v1745 = vmax.f32 %v1627, 0.0
        %v1746 = vmax.f32 %v1692, 0.0
        %v1747 = vmax.f32 %v1500, 0.0
        %v1748 = vmax.f32 %v1565, 0.0
        %v1749 = vmax.f32 %v1630, 0.0
        %v1750 = vmax.f32 %v1695, 0.0
        %v1751 = vmax.f32 %v1503, 0.0
        %v1752 = vmax.f32 %v1568, 0.0
        %v1753 = vmax.f32 %v1633, 0.0
        %v1754 = vmax.f32 %v1698, 0.0
        %v1755 = vmax.f32 %v1506, 0.0
        %v1756 = vmax.f32 %v1571, 0.0
        %v1757 = vmax.f32 %v1636, 0.0
        %v1758 = vmax.f32 %v1701, 0.0
        %v1759 = vmax.f32 %v1509, 0.0
        %v1760 = vmax.f32 %v1574, 0.0
        %v1761 = vmax.f32 %v1639, 0.0
        %v1762 = vmax.f32 %v1704, 0.0
        %v1763 = vmax.f32 %v1512, 0.0
        %v1764 = vmax.f32 %v1577, 0.0
        %v1765 = vmax.f32 %v1642, 0.0
        %v1766 = vmax.f32 %v1707, 0.0
        %v1767 = vmax.f32 %v1515, 0.0
        %v1768 = vmax.f32 %v1580, 0.0
        %v1769 = vmax.f32 %v1645, 0.0
        %v1770 = vmax.f32 %v1710, 0.0
        %v1771 = vmax.f32 %v1518, 0.0
        %v1772 = vmax.f32 %v1583, 0.0
        %v1773 = vmax.f32 %v1648, 0.0
        %v1774 = vmax.f32 %v1713, 0.0
        %v1775 = vmax.f32 %v1521, 0.0
        %v1776 = vmax.f32 %v1586, 0.0
        %v1777 = vmax.f32 %v1651, 0.0
        %v1778 = vmax.f32 %v1716, 0.0
        %v1779 = vmax.f32 %v1524, 0.0
        %v1780 = vmax.f32 %v1589, 0.0
        %v1781 = vmax.f32 %v1654, 0.0
        %v1782 = vmax.f32 %v1719, 0.0
        %v1783 = vmax.f32 %v1527, 0.0
        %v1784 = vmax.f32 %v1592, 0.0
        %v1785 = vmax.f32 %v1657, 0.0
        %v1786 = vmax.f32 %v1722, 0.0
        %v1787 = vmax.f32 %v1530, 0.0
        %v1788 = vmax.f32 %v1595, 0.0
        %v1789 = vmax.f32 %v1660, 0.0
        %v1790 = vmax.f32 %v1725, 0.0
        %v1791 = vld [vmem:[#allocation9] sm:$0xff]
        %v1792 = vld [vmem:[#allocation9 + $0x8] sm:$0xff]
        %v1793 = vld [vmem:[#allocation9 + $0x10] sm:$0xff]
        %v1794 = vld [vmem:[#allocation9 + $0x18] sm:$0xff]
        %v1795 = vld [vmem:[#allocation9 + $0x20] sm:$0xff]
        %v1796 = vld [vmem:[#allocation9 + $0x28] sm:$0xff]
        %v1797 = vld [vmem:[#allocation9 + $0x30] sm:$0xff]
        %v1798 = vld [vmem:[#allocation9 + $0x38] sm:$0xff]
        %v1799 = vld [vmem:[#allocation9 + $0x40] sm:$0xff]
        %v1800 = vld [vmem:[#allocation9 + $0x48] sm:$0xff]
        %v1801 = vld [vmem:[#allocation9 + $0x50] sm:$0xff]
        %v1802 = vld [vmem:[#allocation9 + $0x58] sm:$0xff]
        %v1803 = vld [vmem:[#allocation9 + $0x60] sm:$0xff]
        %v1804 = vld [vmem:[#allocation9 + $0x68] sm:$0xff]
        %v1805 = vld [vmem:[#allocation9 + $0x70] sm:$0xff]
        %v1806 = vld [vmem:[#allocation9 + $0x78] sm:$0xff]
        %v1807 = vld [vmem:[#allocation9 + $0x80] sm:$0xff]
        %v1808 = vld [vmem:[#allocation9 + $0x88] sm:$0xff]
        %v1809 = vld [vmem:[#allocation9 + $0x90] sm:$0xff]
        %v1810 = vld [vmem:[#allocation9 + $0x98] sm:$0xff]
        %v1811 = vld [vmem:[#allocation9 + $0xa0] sm:$0xff]
        %v1812 = vld [vmem:[#allocation9 + $0xa8] sm:$0xff]
        %v1813 = vld [vmem:[#allocation9 + $0xb0] sm:$0xff]
        %v1814 = vld [vmem:[#allocation9 + $0xb8] sm:$0xff]
        %v1815 = vld [vmem:[#allocation9 + $0xc0] sm:$0xff]
        %v1816 = vld [vmem:[#allocation9 + $0xc8] sm:$0xff]
        %v1817 = vld [vmem:[#allocation9 + $0xd0] sm:$0xff]
        %v1818 = vld [vmem:[#allocation9 + $0xd8] sm:$0xff]
        %v1819 = vld [vmem:[#allocation9 + $0xe0] sm:$0xff]
        %v1820 = vld [vmem:[#allocation9 + $0xe8] sm:$0xff]
        %v1821 = vld [vmem:[#allocation9 + $0xf0] sm:$0xff]
        %v1822 = vld [vmem:[#allocation9 + $0xf8] sm:$0xff]
        %v1823 = vld [vmem:[#allocation9 + $0x100] sm:$0xff]
        %v1824 = vld [vmem:[#allocation9 + $0x108] sm:$0xff]
        %v1825 = vld [vmem:[#allocation9 + $0x110] sm:$0xff]
        %v1826 = vld [vmem:[#allocation9 + $0x118] sm:$0xff]
        %v1827 = vld [vmem:[#allocation9 + $0x120] sm:$0xff]
        %v1828 = vld [vmem:[#allocation9 + $0x128] sm:$0xff]
        %v1829 = vld [vmem:[#allocation9 + $0x130] sm:$0xff]
        %v1830 = vld [vmem:[#allocation9 + $0x138] sm:$0xff]
        %v1831 = vld [vmem:[#allocation9 + $0x140] sm:$0xff]
        %v1832 = vld [vmem:[#allocation9 + $0x148] sm:$0xff]
        %v1833 = vld [vmem:[#allocation9 + $0x150] sm:$0xff]
        %v1834 = vld [vmem:[#allocation9 + $0x158] sm:$0xff]
        %v1835 = vld [vmem:[#allocation9 + $0x160] sm:$0xff]
        %v1836 = vld [vmem:[#allocation9 + $0x168] sm:$0xff]
        %v1837 = vld [vmem:[#allocation9 + $0x170] sm:$0xff]
        %v1838 = vld [vmem:[#allocation9 + $0x178] sm:$0xff]
        %v1839 = vld [vmem:[#allocation9 + $0x180] sm:$0xff]
        %v1840 = vld [vmem:[#allocation9 + $0x188] sm:$0xff]
        %v1841 = vld [vmem:[#allocation9 + $0x190] sm:$0xff]
        %v1842 = vld [vmem:[#allocation9 + $0x198] sm:$0xff]
        %v1843 = vld [vmem:[#allocation9 + $0x1a0] sm:$0xff]
        %v1844 = vld [vmem:[#allocation9 + $0x1a8] sm:$0xff]
        %v1845 = vld [vmem:[#allocation9 + $0x1b0] sm:$0xff]
        %v1846 = vld [vmem:[#allocation9 + $0x1b8] sm:$0xff]
        %v1847 = vld [vmem:[#allocation9 + $0x1c0] sm:$0xff]
        %v1848 = vld [vmem:[#allocation9 + $0x1c8] sm:$0xff]
        %v1849 = vld [vmem:[#allocation9 + $0x1d0] sm:$0xff]
        %v1850 = vld [vmem:[#allocation9 + $0x1d8] sm:$0xff]
        %v1851 = vld [vmem:[#allocation9 + $0x1e0] sm:$0xff]
        %v1852 = vld [vmem:[#allocation9 + $0x1e8] sm:$0xff]
        %v1853 = vld [vmem:[#allocation9 + $0x1f0] sm:$0xff]
        %v1854 = vld [vmem:[#allocation9 + $0x1f8] sm:$0xff]
        %v1855 = vld [vmem:[%s10] sm:$0x1]
        %v1857 = vperm.slane %v1855, 0
        %1859 = vmatpush.msra.mxu0 %v1806
        %1860 = vmatpush.msra.mxu0 %v1805
        %1861 = vmatpush.msra.mxu0 %v1804
        %1862 = vmatpush.msra.mxu0 %v1803
        %1863 = vmatpush.msra.mxu0 %v1802
        %1864 = vmatpush.msra.mxu0 %v1801
        %1865 = vmatpush.msra.mxu0 %v1800
        %1866 = vmatpush.msra.mxu0 %v1799
        %1867 = vmatpush.msra.mxu0 %v1798
        %1868 = vmatpush.msra.mxu0 %v1797
        %1869 = vmatpush.msra.mxu0 %v1796
        %1870 = vmatpush.msra.mxu0 %v1795
        %1871 = vmatpush.msra.mxu0 %v1794
        %1872 = vmatpush.msra.mxu0 %v1793
        %1873 = vmatpush.msra.mxu0 %v1792
        %1874 = vmatpush.msra.mxu0 %v1791
        %1875 = vmatmul.f32.gmra.mxu0 %v1727
        %v1876 = vpop.f32.mrf.mxu0
        %v1877 = vadd.f32 %v1857, %v1876
        %1878 = vmatmul.f32.gmra.mxu0 %v1731
        %v1879 = vpop.f32.mrf.mxu0
        %v1880 = vadd.f32 %v1857, %v1879
        %1881 = vmatmul.f32.gmra.mxu0 %v1735
        %v1882 = vpop.f32.mrf.mxu0
        %v1883 = vadd.f32 %v1857, %v1882
        %1884 = vmatmul.f32.gmra.mxu0 %v1739
        %v1885 = vpop.f32.mrf.mxu0
        %v1886 = vadd.f32 %v1857, %v1885
        %1887 = vmatmul.f32.gmra.mxu0 %v1743
        %v1888 = vpop.f32.mrf.mxu0
        %v1889 = vadd.f32 %v1857, %v1888
        %1890 = vmatmul.f32.gmra.mxu0 %v1747
        %v1891 = vpop.f32.mrf.mxu0
        %v1892 = vadd.f32 %v1857, %v1891
        %1893 = vmatmul.f32.gmra.mxu0 %v1751
        %v1894 = vpop.f32.mrf.mxu0
        %v1895 = vadd.f32 %v1857, %v1894
        %1896 = vmatmul.f32.gmra.mxu0 %v1755
        %v1897 = vpop.f32.mrf.mxu0
        %v1898 = vadd.f32 %v1857, %v1897
        %1899 = vmatmul.f32.gmra.mxu0 %v1759
        %v1900 = vpop.f32.mrf.mxu0
        %v1901 = vadd.f32 %v1857, %v1900
        %1902 = vmatmul.f32.gmra.mxu0 %v1763
        %v1903 = vpop.f32.mrf.mxu0
        %v1904 = vadd.f32 %v1857, %v1903
        %1905 = vmatmul.f32.gmra.mxu0 %v1767
        %v1906 = vpop.f32.mrf.mxu0
        %v1907 = vadd.f32 %v1857, %v1906
        %1908 = vmatmul.f32.gmra.mxu0 %v1771
        %v1909 = vpop.f32.mrf.mxu0
        %v1910 = vadd.f32 %v1857, %v1909
        %1911 = vmatmul.f32.gmra.mxu0 %v1775
        %v1912 = vpop.f32.mrf.mxu0
        %v1913 = vadd.f32 %v1857, %v1912
        %1914 = vmatmul.f32.gmra.mxu0 %v1779
        %v1915 = vpop.f32.mrf.mxu0
        %v1916 = vadd.f32 %v1857, %v1915
        %1917 = vmatmul.f32.gmra.mxu0 %v1783
        %v1918 = vpop.f32.mrf.mxu0
        %v1919 = vadd.f32 %v1857, %v1918
        %1920 = vmatmul.f32.gmra.mxu0 %v1787
        %v1921 = vpop.f32.mrf.mxu0
        %v1922 = vadd.f32 %v1857, %v1921
        %1923 = vdwg.mxu0
        %1924 = vmatpush.msra.mxu0 %v1822
        %1925 = vmatpush.msra.mxu0 %v1821
        %1926 = vmatpush.msra.mxu0 %v1820
        %1927 = vmatpush.msra.mxu0 %v1819
        %1928 = vmatpush.msra.mxu0 %v1818
        %1929 = vmatpush.msra.mxu0 %v1817
        %1930 = vmatpush.msra.mxu0 %v1816
        %1931 = vmatpush.msra.mxu0 %v1815
        %1932 = vmatpush.msra.mxu0 %v1814
        %1933 = vmatpush.msra.mxu0 %v1813
        %1934 = vmatpush.msra.mxu0 %v1812
        %1935 = vmatpush.msra.mxu0 %v1811
        %1936 = vmatpush.msra.mxu0 %v1810
        %1937 = vmatpush.msra.mxu0 %v1809
        %1938 = vmatpush.msra.mxu0 %v1808
        %1939 = vmatpush.msra.mxu0 %v1807
        %1940 = vmatmul.f32.gmra.mxu0 %v1728
        %v1941 = vpop.f32.mrf.mxu0
        %v1942 = vadd.f32 %v1877, %v1941
        %1943 = vmatmul.f32.gmra.mxu0 %v1732
        %v1944 = vpop.f32.mrf.mxu0
        %v1945 = vadd.f32 %v1880, %v1944
        %1946 = vmatmul.f32.gmra.mxu0 %v1736
        %v1947 = vpop.f32.mrf.mxu0
        %v1948 = vadd.f32 %v1883, %v1947
        %1949 = vmatmul.f32.gmra.mxu0 %v1740
        %v1950 = vpop.f32.mrf.mxu0
        %v1951 = vadd.f32 %v1886, %v1950
        %1952 = vmatmul.f32.gmra.mxu0 %v1744
        %v1953 = vpop.f32.mrf.mxu0
        %v1954 = vadd.f32 %v1889, %v1953
        %1955 = vmatmul.f32.gmra.mxu0 %v1748
        %v1956 = vpop.f32.mrf.mxu0
        %v1957 = vadd.f32 %v1892, %v1956
        %1958 = vmatmul.f32.gmra.mxu0 %v1752
        %v1959 = vpop.f32.mrf.mxu0
        %v1960 = vadd.f32 %v1895, %v1959
        %1961 = vmatmul.f32.gmra.mxu0 %v1756
        %v1962 = vpop.f32.mrf.mxu0
        %v1963 = vadd.f32 %v1898, %v1962
        %1964 = vmatmul.f32.gmra.mxu0 %v1760
        %v1965 = vpop.f32.mrf.mxu0
        %v1966 = vadd.f32 %v1901, %v1965
        %1967 = vmatmul.f32.gmra.mxu0 %v1764
        %v1968 = vpop.f32.mrf.mxu0
        %v1969 = vadd.f32 %v1904, %v1968
        %1970 = vmatmul.f32.gmra.mxu0 %v1768
        %v1971 = vpop.f32.mrf.mxu0
        %v1972 = vadd.f32 %v1907, %v1971
        %1973 = vmatmul.f32.gmra.mxu0 %v1772
        %v1974 = vpop.f32.mrf.mxu0
        %v1975 = vadd.f32 %v1910, %v1974
        %1976 = vmatmul.f32.gmra.mxu0 %v1776
        %v1977 = vpop.f32.mrf.mxu0
        %v1978 = vadd.f32 %v1913, %v1977
        %1979 = vmatmul.f32.gmra.mxu0 %v1780
        %v1980 = vpop.f32.mrf.mxu0
        %v1981 = vadd.f32 %v1916, %v1980
        %1982 = vmatmul.f32.gmra.mxu0 %v1784
        %v1983 = vpop.f32.mrf.mxu0
        %v1984 = vadd.f32 %v1919, %v1983
        %1985 = vmatmul.f32.gmra.mxu0 %v1788
        %v1986 = vpop.f32.mrf.mxu0
        %v1987 = vadd.f32 %v1922, %v1986
        %1988 = vdwg.mxu0
        %1989 = vmatpush.msra.mxu0 %v1838
        %1990 = vmatpush.msra.mxu0 %v1837
        %1991 = vmatpush.msra.mxu0 %v1836
        %1992 = vmatpush.msra.mxu0 %v1835
        %1993 = vmatpush.msra.mxu0 %v1834
        %1994 = vmatpush.msra.mxu0 %v1833
        %1995 = vmatpush.msra.mxu0 %v1832
        %1996 = vmatpush.msra.mxu0 %v1831
        %1997 = vmatpush.msra.mxu0 %v1830
        %1998 = vmatpush.msra.mxu0 %v1829
        %1999 = vmatpush.msra.mxu0 %v1828
        %2000 = vmatpush.msra.mxu0 %v1827
        %2001 = vmatpush.msra.mxu0 %v1826
        %2002 = vmatpush.msra.mxu0 %v1825
        %2003 = vmatpush.msra.mxu0 %v1824
        %2004 = vmatpush.msra.mxu0 %v1823
        %2005 = vmatmul.f32.gmra.mxu0 %v1729
        %v2006 = vpop.f32.mrf.mxu0
        %v2007 = vadd.f32 %v1942, %v2006
        %2008 = vmatmul.f32.gmra.mxu0 %v1733
        %v2009 = vpop.f32.mrf.mxu0
        %v2010 = vadd.f32 %v1945, %v2009
        %2011 = vmatmul.f32.gmra.mxu0 %v1737
        %v2012 = vpop.f32.mrf.mxu0
        %v2013 = vadd.f32 %v1948, %v2012
        %2014 = vmatmul.f32.gmra.mxu0 %v1741
        %v2015 = vpop.f32.mrf.mxu0
        %v2016 = vadd.f32 %v1951, %v2015
        %2017 = vmatmul.f32.gmra.mxu0 %v1745
        %v2018 = vpop.f32.mrf.mxu0
        %v2019 = vadd.f32 %v1954, %v2018
        %2020 = vmatmul.f32.gmra.mxu0 %v1749
        %v2021 = vpop.f32.mrf.mxu0
        %v2022 = vadd.f32 %v1957, %v2021
        %2023 = vmatmul.f32.gmra.mxu0 %v1753
        %v2024 = vpop.f32.mrf.mxu0
        %v2025 = vadd.f32 %v1960, %v2024
        %2026 = vmatmul.f32.gmra.mxu0 %v1757
        %v2027 = vpop.f32.mrf.mxu0
        %v2028 = vadd.f32 %v1963, %v2027
        %2029 = vmatmul.f32.gmra.mxu0 %v1761
        %v2030 = vpop.f32.mrf.mxu0
        %v2031 = vadd.f32 %v1966, %v2030
        %2032 = vmatmul.f32.gmra.mxu0 %v1765
        %v2033 = vpop.f32.mrf.mxu0
        %v2034 = vadd.f32 %v1969, %v2033
        %2035 = vmatmul.f32.gmra.mxu0 %v1769
        %v2036 = vpop.f32.mrf.mxu0
        %v2037 = vadd.f32 %v1972, %v2036
        %2038 = vmatmul.f32.gmra.mxu0 %v1773
        %v2039 = vpop.f32.mrf.mxu0
        %v2040 = vadd.f32 %v1975, %v2039
        %2041 = vmatmul.f32.gmra.mxu0 %v1777
        %v2042 = vpop.f32.mrf.mxu0
        %v2043 = vadd.f32 %v1978, %v2042
        %2044 = vmatmul.f32.gmra.mxu0 %v1781
        %v2045 = vpop.f32.mrf.mxu0
        %v2046 = vadd.f32 %v1981, %v2045
        %2047 = vmatmul.f32.gmra.mxu0 %v1785
        %v2048 = vpop.f32.mrf.mxu0
        %v2049 = vadd.f32 %v1984, %v2048
        %2050 = vmatmul.f32.gmra.mxu0 %v1789
        %v2051 = vpop.f32.mrf.mxu0
        %v2052 = vadd.f32 %v1987, %v2051
        %2053 = vdwg.mxu0
        %2054 = vmatpush.msra.mxu0 %v1854
        %2055 = vmatpush.msra.mxu0 %v1853
        %2056 = vmatpush.msra.mxu0 %v1852
        %2057 = vmatpush.msra.mxu0 %v1851
        %2058 = vmatpush.msra.mxu0 %v1850
        %2059 = vmatpush.msra.mxu0 %v1849
        %2060 = vmatpush.msra.mxu0 %v1848
        %2061 = vmatpush.msra.mxu0 %v1847
        %2062 = vmatpush.msra.mxu0 %v1846
        %2063 = vmatpush.msra.mxu0 %v1845
        %2064 = vmatpush.msra.mxu0 %v1844
        %2065 = vmatpush.msra.mxu0 %v1843
        %2066 = vmatpush.msra.mxu0 %v1842
        %2067 = vmatpush.msra.mxu0 %v1841
        %2068 = vmatpush.msra.mxu0 %v1840
        %2069 = vmatpush.msra.mxu0 %v1839
        %2070 = vmatmul.f32.gmra.mxu0 %v1730
        %v2071 = vpop.f32.mrf.mxu0
        %v2072 = vadd.f32 %v2007, %v2071
        %2073 = vmatmul.f32.gmra.mxu0 %v1734
        %v2074 = vpop.f32.mrf.mxu0
        %v2075 = vadd.f32 %v2010, %v2074
        %2076 = vmatmul.f32.gmra.mxu0 %v1738
        %v2077 = vpop.f32.mrf.mxu0
        %v2078 = vadd.f32 %v2013, %v2077
        %2079 = vmatmul.f32.gmra.mxu0 %v1742
        %v2080 = vpop.f32.mrf.mxu0
        %v2081 = vadd.f32 %v2016, %v2080
        %2082 = vmatmul.f32.gmra.mxu0 %v1746
        %v2083 = vpop.f32.mrf.mxu0
        %v2084 = vadd.f32 %v2019, %v2083
        %2085 = vmatmul.f32.gmra.mxu0 %v1750
        %v2086 = vpop.f32.mrf.mxu0
        %v2087 = vadd.f32 %v2022, %v2086
        %2088 = vmatmul.f32.gmra.mxu0 %v1754
        %v2089 = vpop.f32.mrf.mxu0
        %v2090 = vadd.f32 %v2025, %v2089
        %2091 = vmatmul.f32.gmra.mxu0 %v1758
        %v2092 = vpop.f32.mrf.mxu0
        %v2093 = vadd.f32 %v2028, %v2092
        %2094 = vmatmul.f32.gmra.mxu0 %v1762
        %v2095 = vpop.f32.mrf.mxu0
        %v2096 = vadd.f32 %v2031, %v2095
        %2097 = vmatmul.f32.gmra.mxu0 %v1766
        %v2098 = vpop.f32.mrf.mxu0
        %v2099 = vadd.f32 %v2034, %v2098
        %2100 = vmatmul.f32.gmra.mxu0 %v1770
        %v2101 = vpop.f32.mrf.mxu0
        %v2102 = vadd.f32 %v2037, %v2101
        %2103 = vmatmul.f32.gmra.mxu0 %v1774
        %v2104 = vpop.f32.mrf.mxu0
        %v2105 = vadd.f32 %v2040, %v2104
        %2106 = vmatmul.f32.gmra.mxu0 %v1778
        %v2107 = vpop.f32.mrf.mxu0
        %v2108 = vadd.f32 %v2043, %v2107
        %2109 = vmatmul.f32.gmra.mxu0 %v1782
        %v2110 = vpop.f32.mrf.mxu0
        %v2111 = vadd.f32 %v2046, %v2110
        %2112 = vmatmul.f32.gmra.mxu0 %v1786
        %v2113 = vpop.f32.mrf.mxu0
        %v2114 = vadd.f32 %v2049, %v2113
        %2115 = vmatmul.f32.gmra.mxu0 %v1790
        %v2116 = vpop.f32.mrf.mxu0
        %v2117 = vadd.f32 %v2052, %v2116
        %2118 = vdwg.mxu0
        %2119 = vxpose.xlu0.b32.start [1/16] %v2072, 128
        %2120 = vxpose.xlu0.b32.cont [2/16] %v2075, 128
        %2121 = vxpose.xlu0.b32.cont [3/16] %v2078, 128
        %2122 = vxpose.xlu0.b32.cont [4/16] %v2081, 128
        %2123 = vxpose.xlu0.b32.cont [5/16] %v2084, 128
        %2124 = vxpose.xlu0.b32.cont [6/16] %v2087, 128
        %2125 = vxpose.xlu0.b32.cont [7/16] %v2090, 128
        %2126 = vxpose.xlu0.b32.cont [8/16] %v2093, 128
        %2127 = vxpose.xlu0.b32.cont [9/16] %v2096, 128
        %2128 = vxpose.xlu0.b32.cont [10/16] %v2099, 128
        %2129 = vxpose.xlu0.b32.cont [11/16] %v2102, 128
        %2130 = vxpose.xlu0.b32.cont [12/16] %v2105, 128
        %2131 = vxpose.xlu0.b32.cont [13/16] %v2108, 128
        %2132 = vxpose.xlu0.b32.cont [14/16] %v2111, 128
        %2133 = vxpose.xlu0.b32.cont [15/16] %v2114, 128
        %2134 = vxpose.xlu0.b32.end [16/16] %v2117, 128
        %v2135 = vpop.trf.xlu0
        %v2136 = vpop.trf.xlu0
        %v2137 = vpop.trf.xlu0
        %v2138 = vpop.trf.xlu0
        %v2139 = vpop.trf.xlu0
        %v2140 = vpop.trf.xlu0
        %v2141 = vpop.trf.xlu0
        %v2142 = vpop.trf.xlu0
        %v2143 = vpop.trf.xlu0
        %v2144 = vpop.trf.xlu0
        %v2145 = vpop.trf.xlu0
        %v2146 = vpop.trf.xlu0
        %v2147 = vpop.trf.xlu0
        %v2148 = vpop.trf.xlu0
        %v2149 = vpop.trf.xlu0
        %v2150 = vpop.trf.xlu0
        %v2151 = vld [vmem:[%s11] sm:$0xff]
        %v2152 = vld [vmem:[%s11 + $0x8] sm:$0xff]
        %v2153 = vld [vmem:[%s11 + $0x10] sm:$0xff]
        %v2154 = vld [vmem:[%s11 + $0x18] sm:$0xff]
        %v2155 = vld [vmem:[%s11 + $0x20] sm:$0xff]
        %v2156 = vld [vmem:[%s11 + $0x28] sm:$0xff]
        %v2157 = vld [vmem:[%s11 + $0x30] sm:$0xff]
        %v2158 = vld [vmem:[%s11 + $0x38] sm:$0xff]
        %v2159 = vld [vmem:[%s11 + $0x40] sm:$0xff]
        %v2160 = vld [vmem:[%s11 + $0x48] sm:$0xff]
        %v2161 = vld [vmem:[%s11 + $0x50] sm:$0xff]
        %v2162 = vld [vmem:[%s11 + $0x58] sm:$0xff]
        %v2163 = vld [vmem:[%s11 + $0x60] sm:$0xff]
        %v2164 = vld [vmem:[%s11 + $0x68] sm:$0xff]
        %v2165 = vld [vmem:[%s11 + $0x70] sm:$0xff]
        %v2166 = vld [vmem:[%s11 + $0x78] sm:$0xff]
        %2168 = vset.pattern.permute.xlu0 0
        %2169 = vperm.xlu0 %2168, %v2151
        %v2170 = vpop.permute.xlu0 %2169
        %2173 = vset.pattern.permute.xlu0 0
        %2174 = vperm.xlu0 %2173, %v2152
        %v2175 = vpop.permute.xlu0 %2174
        %2178 = vset.pattern.permute.xlu0 0
        %2179 = vperm.xlu0 %2178, %v2153
        %v2180 = vpop.permute.xlu0 %2179
        %2183 = vset.pattern.permute.xlu0 0
        %2184 = vperm.xlu0 %2183, %v2154
        %v2185 = vpop.permute.xlu0 %2184
        %2188 = vset.pattern.permute.xlu0 0
        %2189 = vperm.xlu0 %2188, %v2155
        %v2190 = vpop.permute.xlu0 %2189
        %2193 = vset.pattern.permute.xlu0 0
        %2194 = vperm.xlu0 %2193, %v2156
        %v2195 = vpop.permute.xlu0 %2194
        %2198 = vset.pattern.permute.xlu0 0
        %2199 = vperm.xlu0 %2198, %v2157
        %v2200 = vpop.permute.xlu0 %2199
        %2203 = vset.pattern.permute.xlu0 0
        %2204 = vperm.xlu0 %2203, %v2158
        %v2205 = vpop.permute.xlu0 %2204
        %2208 = vset.pattern.permute.xlu0 0
        %2209 = vperm.xlu0 %2208, %v2159
        %v2210 = vpop.permute.xlu0 %2209
        %2213 = vset.pattern.permute.xlu0 0
        %2214 = vperm.xlu0 %2213, %v2160
        %v2215 = vpop.permute.xlu0 %2214
        %2218 = vset.pattern.permute.xlu0 0
        %2219 = vperm.xlu0 %2218, %v2161
        %v2220 = vpop.permute.xlu0 %2219
        %2223 = vset.pattern.permute.xlu0 0
        %2224 = vperm.xlu0 %2223, %v2162
        %v2225 = vpop.permute.xlu0 %2224
        %2228 = vset.pattern.permute.xlu0 0
        %2229 = vperm.xlu0 %2228, %v2163
        %v2230 = vpop.permute.xlu0 %2229
        %2233 = vset.pattern.permute.xlu0 0
        %2234 = vperm.xlu0 %2233, %v2164
        %v2235 = vpop.permute.xlu0 %2234
        %2238 = vset.pattern.permute.xlu0 0
        %2239 = vperm.xlu0 %2238, %v2165
        %v2240 = vpop.permute.xlu0 %2239
        %2243 = vset.pattern.permute.xlu0 0
        %2244 = vperm.xlu0 %2243, %v2166
        %v2245 = vpop.permute.xlu0 %2244
        %v2247 = vmul.f32 %v2135, %v2170
        %v2248 = vmul.f32 %v2136, %v2175
        %v2249 = vmul.f32 %v2137, %v2180
        %v2250 = vmul.f32 %v2138, %v2185
        %v2251 = vmul.f32 %v2139, %v2190
        %v2252 = vmul.f32 %v2140, %v2195
        %v2253 = vmul.f32 %v2141, %v2200
        %v2254 = vmul.f32 %v2142, %v2205
        %v2255 = vmul.f32 %v2143, %v2210
        %v2256 = vmul.f32 %v2144, %v2215
        %v2257 = vmul.f32 %v2145, %v2220
        %v2258 = vmul.f32 %v2146, %v2225
        %v2259 = vmul.f32 %v2147, %v2230
        %v2260 = vmul.f32 %v2148, %v2235
        %v2261 = vmul.f32 %v2149, %v2240
        %v2262 = vmul.f32 %v2150, %v2245
        %v2263 = vadd.f32 %v2247, %v2248
        %v2264 = vadd.f32 %v2263, %v2249
        %v2265 = vadd.f32 %v2264, %v2250
        %v2266 = vadd.f32 %v2265, %v2251
        %v2267 = vadd.f32 %v2266, %v2252
        %v2268 = vadd.f32 %v2267, %v2253
        %v2269 = vadd.f32 %v2268, %v2254
        %v2270 = vadd.f32 %v2269, %v2255
        %v2271 = vadd.f32 %v2270, %v2256
        %v2272 = vadd.f32 %v2271, %v2257
        %v2273 = vadd.f32 %v2272, %v2258
        %v2274 = vadd.f32 %v2273, %v2259
        %v2275 = vadd.f32 %v2274, %v2260
        %v2276 = vadd.f32 %v2275, %v2261
        %v2277 = vadd.f32 %v2276, %v2262
        %v2278 = vrot.slane %v2277, 4
        %v2279 = vadd.f32 %v2277, %v2278
        %v2280 = vrot.slane %v2279, 2
        %v2281 = vadd.f32 %v2279, %v2280
        %v2282 = vrot.slane %v2281, 1
        %v2283 = vadd.f32 %v2281, %v2282
        %v2284 = vld [vmem:[#allocation2] sm:$0x1]
        %2286 = vset.pattern.permute.xlu0 0
        %2287 = vperm.xlu0 %2286, %v2284
        %v2288 = vpop.permute.xlu0 %2287
        %v2290 = vperm.slane %v2288, 0
        %v2291 = vadd.f32 %v2283, %v2290
        %v2292 = vxor.u32 %v2291, 2147483648
        %v2293 = vmul.f32 %v2292, 1.442695
        %v2294 = vpow.pop %v2293
        %v2295 = vadd.f32 %v2294, 1.0
        %v2296 = vrcp.pop %v2295
        %v2297 = vmul.f32 %v2295, %v2296
        %v2298 = vsub.f32 1.0, %v2297
        %v2299 = vmul.f32 %v2296, %v2298
        %v2300 = vadd.f32 %v2296, %v2299
        %vm2301 = vweird.f32 %v2295
        %vm2302 = vweird.f32 %v2296
        %vm2303 = vmor %vm2301, %vm2302
        %v2304 = vsel %vm2303, %v2296, %v2300
        %v2305 = vand.u32 2147483647, %v2295
        %vm2306 = vcmp.eq.f32.partialorder %v2305, 8.507059e+37
        %v2307 = vand.u32 %v2295, 2147483648
        %v2308 = vor.u32 1.1754944e-38, %v2307
        %v2309 = vsel %vm2306, %v2308, %v2304
        %v2310 = vmul.f32 1.0, %v2309
        %2311 = vst [vmem:[%s502] sm:$0x1] %v2310
        %s2312 = sand.u32 %s318, 1
        %s2313 = scalar_lea.sflag [#allocation5], %s2312
        %s2314 = sand.u32 %s318, 1
        %s2315 = scalar_lea.vmem [#allocation11], %s2314
        // Predicated region
        $region89: #{tpu_custom_call.1} parent=71 // pred_check
          %p2316 = pneg %p328
        $region90: #{tpu_custom_call.1} parent=71 // pred_check_branch
          %2318 = sbr.rel (%p2316) target = $region92
        $region91: #{tpu_custom_call.1} parent=71 // pred_region
          %2320 = vsyncadd %s2313, 0
          %s2321 = scalar_lea.hbm %s13, %s32
          %s2323 = sshll.u32 %s2315, 4
          %s2324 = int_to_ptr.vmem [resolvable:$true] %s2323
          %s2325 = sshll.u32 %s2321, 4
          %s2326 = int_to_ptr.hbm [resolvable:$true] %s2325
          %2328 = dma.vmem_to_hbm [thread:$0]  %s2324, 16, %s2326, %s2313
        $region92: #{tpu_custom_call.1} parent=71 // pred_fallthru
          _
      $region72: #{tpu_custom_call.1} parent=5 // pred_fallthru
        _
      %p2329 = scmp.le.s32.totalorder 2, %s27
      // Predicated region
      $region93: #{tpu_custom_call.1} parent=5 // pred_check
        %p2330 = pneg %p2329
      $region94: #{tpu_custom_call.1} parent=5 // pred_check_branch
        %2332 = sbr.rel (%p2330) target = $region96
      $region95: #{tpu_custom_call.1} parent=5 // pred_region
        %s2333 = ssub.s32 %s27, 2
        // Predicated region
        $region97: #{tpu_custom_call.1} parent=95 // pred_check
          %p2334 = pneg %p334
        $region98: #{tpu_custom_call.1} parent=95 // pred_check_branch
          %2336 = sbr.rel (%p2334) target = $region100
        $region99: #{tpu_custom_call.1} parent=95 // pred_region
          %s2337 = sand.u32 %s319, 1
          %s2338 = scalar_lea.sflag [#allocation5], %s2337
          %s2339 = sand.u32 %s319, 1
          %s2340 = scalar_lea.vmem [#allocation11], %s2339
          %2342 = dma.done %s2338, 16
        $region100: #{tpu_custom_call.1} parent=95 // pred_fallthru
          _
      $region96: #{tpu_custom_call.1} parent=5 // pred_fallthru
        _
    $region6: #{tpu_custom_call.1} parent=1 // loop_footer
      %s31 = sadd.s32 1, %s27
    $region7: #{tpu_custom_call.1} parent=1 // loop_footer_branch
      %26 = sbr.rel target = $region3
    $region8: #{tpu_custom_call.1} parent=1 // loop_exit
      _
    %2343 = vsyncpa [#allocation4], 1
    %s2344 = scalar_lea.sflag [#allocation4], 1
    %2345 = vsyncpa %s2344, 1
    %2346 = vsyncpa [#allocation7], 1
    %2347 = vsyncpa [#allocation10], 1
    %2348 = vsyncpa [#allocation5], 1
    %s2349 = scalar_lea.sflag [#allocation5], 1
    %2350 = vsyncpa %s2349, 1

</llo_original>
